<compile_context>
chip_gen: v5e
topology: v5e:2x2
jax: 0.10.0
libtpu: 0.0.40
codegen_flags: <defaults>
</compile_context>

<pallas_src>
import functools

import numpy as np
import jax
import jax.numpy as jnp
from jax import lax
from jax.experimental import pallas as pl
from jax.experimental.pallas import tpu as pltpu  # noqa: F401  (TPU backend)


# ---------------------------------------------------------------------------
# One-time parameter preparation (outside jit): PyTorch-layout weights ->
# matmul-ready block / banded / scatter constants, built in numpy.
# ---------------------------------------------------------------------------
def prepare_constants(params, B, latent):
    assert B * 5 <= 16 and B <= 8, "geometry below is sized for small batch"
    f32 = np.float32
    P = {k: np.asarray(v, f32) for k, v in params.items()}
    w1, b1 = P["enc_w1"], P["enc_b1"]        # (16,3,3,3), (16,)
    w2, b2 = P["enc_w2"], P["enc_b2"]        # (8,16,3,3), (8,)
    wf1, bf1 = P["fc1_w"], P["fc1_b"]        # (latent,32), (latent,)
    wf2, bf2 = P["fc2_w"], P["fc2_b"]        # (32,latent), (32,)
    wd1, bd1 = P["dec_w1"], P["dec_b1"]      # (8,16,3,3), (16,)
    wd2, bd2 = P["dec_w2"], P["dec_b2"]      # (16,8,5,5), (8,)
    wd3, bd3 = P["dec_w3"], P["dec_b3"]      # (8,3,6,6), (3,)
    C = {}

    # conv1: Conv2d(3,16,3,stride=3,padding=1), evaluated only at the 10x10
    # output positions the following MaxPool2d(2,2) consumes.
    #   cols1 rows  = g*16 + b*5 + i  (g = pool-window element (di,dj))
    #   cols1 lanes = j*32 + (ci*9 + dh*3 + dw) ;  h1 lanes = j*16 + co
    w1f = w1.transpose(1, 2, 3, 0).reshape(27, 16)
    W1 = np.zeros((160, 80), f32)
    for j in range(5):
        W1[32 * j:32 * j + 27, 16 * j:16 * j + 16] = w1f
    C["W1"] = W1
    C["b1r"] = np.tile(b1, 5).reshape(1, 80)

    # conv2: Conv2d(16,8,3,stride=2,padding=1) on the pooled 5x5 map, with the
    # MaxPool2d(2,1) window grouping folded into the output lanes:
    #   h2[b, g2*32 + c*4 + oi*2 + oj] = conv2[b, c, oi+di2, oj+dj2].
    # Row block i of W2g multiplies p1 row (b*5+i); SelI sums the 5 blocks.
    W2g = np.zeros((400, 128), f32)
    for i in range(5):
        for j in range(5):
            for di2 in range(2):
                for dj2 in range(2):
                    for oi in range(2):
                        for oj in range(2):
                            dh = i - 2 * (oi + di2) + 1
                            dw = j - 2 * (oj + dj2) + 1
                            if 0 <= dh < 3 and 0 <= dw < 3:
                                col0 = (di2 * 2 + dj2) * 32 + oi * 2 + oj
                                for c1 in range(16):
                                    for c in range(8):
                                        W2g[i * 80 + j * 16 + c1,
                                            col0 + c * 4] = w2[c, c1, dh, dw]
    C["W2g"] = W2g
    C["b2g"] = np.tile(np.repeat(b2, 4), 4).reshape(1, 128)

    SelI = np.zeros((8, 80), f32)
    for b in range(B):
        for i in range(5):
            SelI[b, i * 16 + b * 5 + i] = 1.0
    C["SelI"] = SelI

    # fc1 / fc2 (lane order = PyTorch CHW flatten: c*4 + oi*2 + oj)
    C["Wf1"] = np.ascontiguousarray(wf1.T)               # (32, latent)
    C["bf1"] = bf1.reshape(1, latent)
    C["Wf2"] = np.ascontiguousarray(wf2.T)               # (latent, 32)
    C["bf2"] = bf2.reshape(1, 32)

    # deconv1: ConvTranspose2d(8,16,3,stride=2), 2x2 -> 5x5.
    # Row block oh of Wd1 produces output row oh; rows(d1)=oh*8+b, lanes=iw*16+c1.
    Wd1 = np.zeros((160, 80), f32)
    for oh in range(5):
        for i0 in range(2):
            kh = oh - 2 * i0
            if not (0 <= kh < 3):
                continue
            for iw in range(5):
                for j0 in range(2):
                    kw = iw - 2 * j0
                    if not (0 <= kw < 3):
                        continue
                    for c0 in range(8):
                        for c1 in range(16):
                            Wd1[32 * oh + c0 * 4 + i0 * 2 + j0,
                                iw * 16 + c1] = wd1[c0, c1, kh, kw]
    C["Wd1"] = Wd1
    C["bd1r"] = np.tile(bd1, 5).reshape(1, 80)

    # deconv2: ConvTranspose2d(16,8,5,stride=3,padding=1), 5x5 -> 15x15.
    # Row block kh of W2d is the vertical tap with kernel row kh; Scat2 sums
    # tap kh of input row ih1 into output row oh2 = 3*ih1 + kh - 1.
    W2d = np.zeros((400, 120), f32)
    for kh in range(5):
        for iw1 in range(5):
            for ow2 in range(15):
                kw = ow2 - 3 * iw1 + 1
                if not (0 <= kw < 5):
                    continue
                for c1 in range(16):
                    for c2 in range(8):
                        W2d[80 * kh + iw1 * 16 + c1,
                            ow2 * 8 + c2] = wd2[c1, c2, kh, kw]
    C["W2d"] = W2d
    C["bd2r"] = np.tile(bd2, 15).reshape(1, 120)

    Scat2 = np.zeros((B * 16, 200), f32)
    for b in range(B):
        for ih1 in range(5):
            for kh in range(5):
                oh2 = 3 * ih1 + kh - 1
                if 0 <= oh2 < 15:
                    Scat2[b * 16 + oh2, kh * 40 + ih1 * 8 + b] = 1.0
    C["Scat2"] = Scat2

    # deconv3: ConvTranspose2d(8,3,6,stride=2,padding=1), 15x15 -> 32x32.
    # Vertical tap sh reads input row ih2 = u + sh - 2 (kernel row kh =
    # ph - 2*sh + 5); Scat3 sums the taps into output row u.  Output lanes =
    # v*12 + ph*6 + pw*3 + c3   (oh3 = 2u+ph, ow3 = 2v+pw).
    W3d = np.zeros((480, 192), f32)
    for sh in range(4):
        for ph in range(2):
            kh = ph - 2 * sh + 5
            if not (0 <= kh < 6):
                continue
            for iw2 in range(15):
                for v in range(16):
                    for pw in range(2):
                        kw = 2 * v + pw - 2 * iw2 + 1
                        if not (0 <= kw < 6):
                            continue
                        for c2 in range(8):
                            for c3 in range(3):
                                W3d[120 * sh + iw2 * 8 + c2,
                                    v * 12 + ph * 6 + pw * 3 + c3] = \
                                    wd3[c2, c3, kh, kw]
    C["W3d"] = W3d
    C["b3r"] = np.tile(bd3, 64).reshape(1, 192)

    Scat3 = np.zeros((B * 16, 4 * B * 16), f32)
    for b in range(B):
        for u in range(16):
            for sh in range(4):
                ih2 = u + sh - 2
                if 0 <= ih2 < 15:
                    Scat3[b * 16 + u, sh * B * 16 + b * 16 + ih2] = 1.0
    C["Scat3"] = Scat3

    return {k: jnp.asarray(v) for k, v in C.items()}


# ---------------------------------------------------------------------------
# Wrapper-side layout plumbing (pad/reshape/transpose only, no gathers)
# ---------------------------------------------------------------------------
def _build_cols1(x, B):
    """im2col for conv1 fused with the pool1 window grouping.

    Row = g*16 + b*5 + i  (g = pool window element (di,dj), rows padded to 16);
    lane = j*32 + (ci*9 + dh*3 + dw);
    value = x_pad[b, ci, 3*(2i+di)+dh, 3*(2j+dj)+dw]   (pad = 1 on top/left).
    """
    xp = jnp.pad(x, ((0, 0), (0, 0), (1, 0), (1, 0)))[:, :, :30, :30]
    xr = xp.reshape(B, 3, 5, 2, 3, 5, 2, 3)          # b ci i di dh j dj dw
    xt = xr.transpose(3, 6, 0, 2, 5, 1, 4, 7)        # di dj b i j ci dh dw
    cols = xt.reshape(4, B * 5, 5, 27)
    cols = jnp.pad(cols, ((0, 0), (0, 16 - B * 5), (0, 0), (0, 5)))
    return cols.reshape(64, 160)


# ---------------------------------------------------------------------------
# The fused Pallas kernel: whole forward pass, all intermediates in VMEM.
# ---------------------------------------------------------------------------
def _fused_kernel(cols1_ref, W1_ref, b1r_ref, W2g_ref, b2g_ref, SelI_ref,
                  Wf1_ref, bf1_ref, Wf2_ref, bf2_ref,
                  Wd1_ref, bd1r_ref, W2d_ref, bd2r_ref, Scat2_ref,
                  W3d_ref, b3r_ref, Scat3_ref,
                  enc_ref, dec_ref, *, B):
    f32 = jnp.float32
    mm = functools.partial(jnp.dot, preferred_element_type=f32)

    # ------------------------------ encoder -------------------------------
    # conv1 + ReLU  (rows = pool-window-element*16 + b*5 + i, lanes = j*16+co)
    h1 = jnp.maximum(mm(cols1_ref[...], W1_ref[...]) + b1r_ref[...], 0.0)

    # pool1: elementwise max of the four aligned 16-row slabs -> (16, 80)
    p1 = jnp.maximum(jnp.maximum(h1[0:16], h1[16:32]),
                     jnp.maximum(h1[32:48], h1[48:64]))

    # conv2 + ReLU with the pool2 window grouping already in the output lanes:
    # one K=80 matmul per p1 spatial row i, then SelI sums the 5 row blocks.
    U = jnp.concatenate(
        [mm(p1, W2g_ref[pl.ds(80 * i, 80), :]) for i in range(5)], axis=0)
    h2 = jnp.maximum(mm(SelI_ref[...], U) + b2g_ref[...], 0.0)        # (8, 128)

    # pool2: max over the four 32-lane groups -> (8, 32), lanes = c*4+oi*2+oj
    p2 = jnp.maximum(jnp.maximum(h2[:, 0:32], h2[:, 32:64]),
                     jnp.maximum(h2[:, 64:96], h2[:, 96:128]))

    # fc1 -> latent code (no activation)
    enc = mm(p2, Wf1_ref[...]) + bf1_ref[...]                          # (8, latent)
    enc_ref[...] = enc[:B, :]

    # ------------------------------ decoder -------------------------------
    # fc2 + ReLU; zero the batch-padding rows so only real data flows on.
    bmask = (lax.broadcasted_iota(jnp.int32, (8, 1), 0) < B).astype(f32)
    d0 = jnp.maximum(mm(enc, Wf2_ref[...]) + bf2_ref[...], 0.0) * bmask   # (8, 32)

    # deconv1 + ReLU: one matmul per output row; rows(d1) = ih1*8 + b,
    # lanes = iw1*16 + c1.
    d1 = jnp.concatenate(
        [mm(d0, Wd1_ref[pl.ds(32 * t, 32), :]) for t in range(5)], axis=0)
    d1 = jnp.maximum(d1 + bd1r_ref[...], 0.0)                          # (40, 80)

    # deconv2 + ReLU: 5 vertical-tap matmuls, then one constant scatter matmul
    # accumulating them into rows b*16 + oh2 (lane-dense: lanes = ow2*8 + c2).
    Z = jnp.concatenate(
        [mm(d1, W2d_ref[pl.ds(80 * k, 80), :]) for k in range(5)], axis=0)
    d2 = mm(Scat2_ref[...], Z) + bd2r_ref[...]                         # (B*16, 120)
    rmask = ((lax.broadcasted_iota(jnp.int32, (B * 16, 1), 0) % 16) < 15)
    d2 = jnp.maximum(d2, 0.0) * rmask.astype(f32)

    # deconv3 (no activation): 4 vertical-tap matmuls + one scatter matmul.
    # Output rows = b*16 + u, lanes = v*12 + ph*6 + pw*3 + c  (lane-dense).
    V = jnp.concatenate(
        [mm(d2, W3d_ref[pl.ds(120 * s, 120), :]) for s in range(4)], axis=0)
    dec_ref[...] = mm(Scat3_ref[...], V) + b3r_ref[...]                # (B*16, 192)


_CONST_ORDER = ("W1", "b1r", "W2g", "b2g", "SelI", "Wf1", "bf1", "Wf2", "bf2",
                "Wd1", "bd1r", "W2d", "bd2r", "Scat2", "W3d", "b3r", "Scat3")


def build_forward(B, latent):
    kernel = functools.partial(_fused_kernel, B=B)

    @jax.jit
    def forward(consts, x):
        cols1 = _build_cols1(x, B)
        ins = [cols1] + [consts[k] for k in _CONST_ORDER]
        enc, dec = pl.pallas_call(
            kernel,
            out_shape=(jax.ShapeDtypeStruct((B, latent), jnp.float32),
                       jax.ShapeDtypeStruct((B * 16, 192), jnp.float32)),
        )(*ins)
        # (b*16+u, v*12 + ph*6 + pw*3 + c)  ->  NCHW (B, 3, 32, 32)
        d = dec.reshape(B, 16, 16, 2, 2, 3).transpose(0, 5, 1, 3, 2, 4)
        return enc, d.reshape(B, 3, 32, 32)

    return forward


# ---------------------------------------------------------------------------
# Pure-JAX/XLA reference of the PyTorch module (for a correctness check)
# ---------------------------------------------------------------------------
def reference_forward(params, x):
    dn = ("NCHW", "OIHW", "NCHW")
    hi = lax.Precision.HIGHEST

    def conv(v, w, b, stride, pad):
        y = lax.conv_general_dilated(v, w, (stride, stride),
                                     [(pad, pad), (pad, pad)],
                                     dimension_numbers=dn, precision=hi)
        return y + b.reshape(1, -1, 1, 1)

    def conv_t(v, w, b, stride, pad):       # PyTorch ConvTranspose2d semantics
        k = w.shape[-1]
        wf = jnp.flip(w, (-2, -1)).transpose(1, 0, 2, 3)
        e = k - 1 - pad
        y = lax.conv_general_dilated(v, wf, (1, 1), [(e, e), (e, e)],
                                     lhs_dilation=(stride, stride),
                                     dimension_numbers=dn, precision=hi)
        return y + b.reshape(1, -1, 1, 1)

    def maxpool(v, k, stride):
        return lax.reduce_window(v, -jnp.inf, lax.max,
                                 (1, 1, k, k), (1, 1, stride, stride), "VALID")

    h = jax.nn.relu(conv(x, params["enc_w1"], params["enc_b1"], 3, 1))
    h = maxpool(h, 2, 2)
    h = jax.nn.relu(conv(h, params["enc_w2"], params["enc_b2"], 2, 1))
    h = maxpool(h, 2, 1)
    flat = h.reshape(h.shape[0], -1)
    enc = jnp.dot(flat, params["fc1_w"].T, precision=hi) + params["fc1_b"]
    d = jax.nn.relu(jnp.dot(enc, params["fc2_w"].T, precision=hi) + params["fc2_b"])
    d = d.reshape(-1, 8, 2, 2)
    d = jax.nn.relu(conv_t(d, params["dec_w1"], params["dec_b1"], 2, 0))
    d = jax.nn.relu(conv_t(d, params["dec_w2"], params["dec_b2"], 3, 1))
    d = conv_t(d, params["dec_w3"], params["dec_b3"], 2, 1)
    return enc, d


# ---------------------------------------------------------------------------
# Synthetic parameters (PyTorch-default-style uniform init, PyTorch layouts)
# ---------------------------------------------------------------------------
def init_params(latent_dim, key):
    def u(k, shape, fan_in):
        bound = 1.0 / float(fan_in) ** 0.5
        return jax.random.uniform(k, shape, jnp.float32, -bound, bound)

    ks = jax.random.split(key, 20)
    N = 8 * 2 * 2
    return {
        # encoder convs (Cout, Cin, k, k)
        "enc_w1": u(ks[0], (16, 3, 3, 3), 3 * 9),   "enc_b1": u(ks[1], (16,), 3 * 9),
        "enc_w2": u(ks[2], (8, 16, 3, 3), 16 * 9),  "enc_b2": u(ks[3], (8,), 16 * 9),
        # fully connected (out, in) like nn.Linear
        "fc1_w": u(ks[4], (latent_dim, N), N),      "fc1_b": u(ks[5], (latent_dim,), N),
        "fc2_w": u(ks[6], (N, latent_dim), latent_dim), "fc2_b": u(ks[7], (N,), latent_dim),
        # decoder conv-transposes (Cin, Cout, k, k) like nn.ConvTranspose2d
        "dec_w1": u(ks[8], (8, 16, 3, 3), 16 * 9),  "dec_b1": u(ks[9], (16,), 16 * 9),
        "dec_w2": u(ks[10], (16, 8, 5, 5), 8 * 25), "dec_b2": u(ks[11], (8,), 8 * 25),
        "dec_w3": u(ks[12], (8, 3, 6, 6), 3 * 36),  "dec_b3": u(ks[13], (3,), 3 * 36),
    }


if __name__ == "__main__":
    B, latent_dim = 2, 8
    key = jax.random.PRNGKey(0)
    xkey, pkey = jax.random.split(key)

    # input: NCHW 32x32 images (the only spatial size consistent with N = 8*2*2)
    x = jax.random.normal(xkey, (B, 3, 32, 32), jnp.float32)
    params = init_params(latent_dim, pkey)

    consts = prepare_constants(params, B, latent_dim)   # one-time, outside jit
    fwd = build_forward(B, latent_dim)

    encoded, recon = fwd(consts, x)
    jax.block_until_ready((encoded, recon))

    assert encoded.shape == (B, latent_dim) and encoded.dtype == jnp.float32
    assert recon.shape == (B, 3, 32, 32) and recon.dtype == jnp.float32

    # correctness check against a pure-JAX re-implementation of the module
    enc_ref, rec_ref = jax.jit(reference_forward)(params, x)
    err_e = float(jnp.max(jnp.abs(encoded - enc_ref)))
    err_r = float(jnp.max(jnp.abs(recon - rec_ref)))
    assert err_e < 1e-2 and err_r < 1e-2, (err_e, err_r)

    print("KERNEL_OK")
</pallas_src>

<mosaic_0001>
module attributes {stable_mosaic.version = 11 : i64} {
  func.func @_fused_kernel(%arg0: memref<64x160xf32, #tpu.memory_space<vmem>>, %arg1: memref<160x80xf32, #tpu.memory_space<vmem>>, %arg2: memref<1x80xf32, #tpu.memory_space<vmem>>, %arg3: memref<400x128xf32, #tpu.memory_space<vmem>>, %arg4: memref<1x128xf32, #tpu.memory_space<vmem>>, %arg5: memref<8x80xf32, #tpu.memory_space<vmem>>, %arg6: memref<32x8xf32, #tpu.memory_space<vmem>>, %arg7: memref<1x8xf32, #tpu.memory_space<vmem>>, %arg8: memref<8x32xf32, #tpu.memory_space<vmem>>, %arg9: memref<1x32xf32, #tpu.memory_space<vmem>>, %arg10: memref<160x80xf32, #tpu.memory_space<vmem>>, %arg11: memref<1x80xf32, #tpu.memory_space<vmem>>, %arg12: memref<400x120xf32, #tpu.memory_space<vmem>>, %arg13: memref<1x120xf32, #tpu.memory_space<vmem>>, %arg14: memref<32x200xf32, #tpu.memory_space<vmem>>, %arg15: memref<480x192xf32, #tpu.memory_space<vmem>>, %arg16: memref<1x192xf32, #tpu.memory_space<vmem>>, %arg17: memref<32x128xf32, #tpu.memory_space<vmem>>, %arg18: memref<2x8xf32, #tpu.memory_space<vmem>>, %arg19: memref<32x192xf32, #tpu.memory_space<vmem>>) attributes {dimension_semantics = [], scalar_prefetch = 0 : i64, scratch_operands = 0 : i64, tpu.core_type = #tpu.core_type<tc>} {
    %c0 = arith.constant 0 : index
    %c0_0 = arith.constant 0 : index
    %0 = vector.load %arg0[%c0, %c0_0] : memref<64x160xf32, #tpu.memory_space<vmem>>, vector<64x160xf32>
    %c0_1 = arith.constant 0 : index
    %c0_2 = arith.constant 0 : index
    %1 = vector.load %arg1[%c0_1, %c0_2] : memref<160x80xf32, #tpu.memory_space<vmem>>, vector<160x80xf32>
    %cst = arith.constant dense<0.000000e+00> : vector<64x80xf32>
    %2 = tpu.matmul %0, %1, %cst {dimension_numbers = #tpu.dot_dimension_numbers<[1], [0], [0], [1], [0, 0, 1, 1], [], []>} : vector<64x160xf32>, vector<160x80xf32>, vector<64x80xf32> -> vector<64x80xf32>
    %c0_3 = arith.constant 0 : index
    %c0_4 = arith.constant 0 : index
    %3 = vector.load %arg2[%c0_3, %c0_4] : memref<1x80xf32, #tpu.memory_space<vmem>>, vector<1x80xf32>
    %4 = vector.broadcast %3 : vector<1x80xf32> to vector<64x80xf32>
    %5 = arith.addf %2, %4 : vector<64x80xf32>
    %cst_5 = arith.constant 0.000000e+00 : f32
    %6 = vector.broadcast %cst_5 : f32 to vector<64x80xf32>
    %7 = arith.maximumf %5, %6 : vector<64x80xf32>
    %8 = vector.extract_strided_slice %7 {offsets = [0, 0], sizes = [16, 80], strides = [1, 1]} : vector<64x80xf32> to vector<16x80xf32>
    %9 = vector.extract_strided_slice %7 {offsets = [16, 0], sizes = [16, 80], strides = [1, 1]} : vector<64x80xf32> to vector<16x80xf32>
    %10 = arith.maximumf %8, %9 : vector<16x80xf32>
    %11 = vector.extract_strided_slice %7 {offsets = [32, 0], sizes = [16, 80], strides = [1, 1]} : vector<64x80xf32> to vector<16x80xf32>
    %12 = vector.extract_strided_slice %7 {offsets = [48, 0], sizes = [16, 80], strides = [1, 1]} : vector<64x80xf32> to vector<16x80xf32>
    %13 = arith.maximumf %11, %12 : vector<16x80xf32>
    %14 = arith.maximumf %10, %13 : vector<16x80xf32>
    %c0_6 = arith.constant 0 : index
    %c0_7 = arith.constant 0 : index
    %15 = vector.load %arg3[%c0_6, %c0_7] : memref<400x128xf32, #tpu.memory_space<vmem>>, vector<80x128xf32>
    %cst_8 = arith.constant dense<0.000000e+00> : vector<16x128xf32>
    %16 = tpu.matmul %14, %15, %cst_8 {dimension_numbers = #tpu.dot_dimension_numbers<[1], [0], [0], [1], [0, 0, 1, 1], [], []>} : vector<16x80xf32>, vector<80x128xf32>, vector<16x128xf32> -> vector<16x128xf32>
    %c80 = arith.constant 80 : index
    %c0_9 = arith.constant 0 : index
    %17 = vector.load %arg3[%c80, %c0_9] : memref<400x128xf32, #tpu.memory_space<vmem>>, vector<80x128xf32>
    %cst_10 = arith.constant dense<0.000000e+00> : vector<16x128xf32>
    %18 = tpu.matmul %14, %17, %cst_10 {dimension_numbers = #tpu.dot_dimension_numbers<[1], [0], [0], [1], [0, 0, 1, 1], [], []>} : vector<16x80xf32>, vector<80x128xf32>, vector<16x128xf32> -> vector<16x128xf32>
    %c160 = arith.constant 160 : index
    %c0_11 = arith.constant 0 : index
    %19 = vector.load %arg3[%c160, %c0_11] : memref<400x128xf32, #tpu.memory_space<vmem>>, vector<80x128xf32>
    %cst_12 = arith.constant dense<0.000000e+00> : vector<16x128xf32>
    %20 = tpu.matmul %14, %19, %cst_12 {dimension_numbers = #tpu.dot_dimension_numbers<[1], [0], [0], [1], [0, 0, 1, 1], [], []>} : vector<16x80xf32>, vector<80x128xf32>, vector<16x128xf32> -> vector<16x128xf32>
    %c240 = arith.constant 240 : index
    %c0_13 = arith.constant 0 : index
    %21 = vector.load %arg3[%c240, %c0_13] : memref<400x128xf32, #tpu.memory_space<vmem>>, vector<80x128xf32>
    %cst_14 = arith.constant dense<0.000000e+00> : vector<16x128xf32>
    %22 = tpu.matmul %14, %21, %cst_14 {dimension_numbers = #tpu.dot_dimension_numbers<[1], [0], [0], [1], [0, 0, 1, 1], [], []>} : vector<16x80xf32>, vector<80x128xf32>, vector<16x128xf32> -> vector<16x128xf32>
    %c320 = arith.constant 320 : index
    %c0_15 = arith.constant 0 : index
    %23 = vector.load %arg3[%c320, %c0_15] : memref<400x128xf32, #tpu.memory_space<vmem>>, vector<80x128xf32>
    %cst_16 = arith.constant dense<0.000000e+00> : vector<16x128xf32>
    %24 = tpu.matmul %14, %23, %cst_16 {dimension_numbers = #tpu.dot_dimension_numbers<[1], [0], [0], [1], [0, 0, 1, 1], [], []>} : vector<16x80xf32>, vector<80x128xf32>, vector<16x128xf32> -> vector<16x128xf32>
    %25 = tpu.concatenate %16, %18, %20, %22, %24 in 0 : vector<16x128xf32>, vector<16x128xf32>, vector<16x128xf32>, vector<16x128xf32>, vector<16x128xf32> -> vector<80x128xf32>
    %c0_17 = arith.constant 0 : index
    %c0_18 = arith.constant 0 : index
    %26 = vector.load %arg5[%c0_17, %c0_18] : memref<8x80xf32, #tpu.memory_space<vmem>>, vector<8x80xf32>
    %cst_19 = arith.constant dense<0.000000e+00> : vector<8x128xf32>
    %27 = tpu.matmul %26, %25, %cst_19 {dimension_numbers = #tpu.dot_dimension_numbers<[1], [0], [0], [1], [0, 0, 1, 1], [], []>} : vector<8x80xf32>, vector<80x128xf32>, vector<8x128xf32> -> vector<8x128xf32>
    %c0_20 = arith.constant 0 : index
    %c0_21 = arith.constant 0 : index
    %28 = vector.load %arg4[%c0_20, %c0_21] : memref<1x128xf32, #tpu.memory_space<vmem>>, vector<1x128xf32>
    %29 = vector.broadcast %28 : vector<1x128xf32> to vector<8x128xf32>
    %30 = arith.addf %27, %29 : vector<8x128xf32>
    %cst_22 = arith.constant 0.000000e+00 : f32
    %31 = vector.broadcast %cst_22 : f32 to vector<8x128xf32>
    %32 = arith.maximumf %30, %31 : vector<8x128xf32>
    %33 = vector.extract_strided_slice %32 {offsets = [0, 0], sizes = [8, 32], strides = [1, 1]} : vector<8x128xf32> to vector<8x32xf32>
    %34 = vector.extract_strided_slice %32 {offsets = [0, 32], sizes = [8, 32], strides = [1, 1]} : vector<8x128xf32> to vector<8x32xf32>
    %35 = arith.maximumf %33, %34 : vector<8x32xf32>
    %36 = vector.extract_strided_slice %32 {offsets = [0, 64], sizes = [8, 32], strides = [1, 1]} : vector<8x128xf32> to vector<8x32xf32>
    %37 = vector.extract_strided_slice %32 {offsets = [0, 96], sizes = [8, 32], strides = [1, 1]} : vector<8x128xf32> to vector<8x32xf32>
    %38 = arith.maximumf %36, %37 : vector<8x32xf32>
    %39 = arith.maximumf %35, %38 : vector<8x32xf32>
    %c0_23 = arith.constant 0 : index
    %c0_24 = arith.constant 0 : index
    %40 = vector.load %arg6[%c0_23, %c0_24] : memref<32x8xf32, #tpu.memory_space<vmem>>, vector<32x8xf32>
    %cst_25 = arith.constant dense<0.000000e+00> : vector<8x8xf32>
    %41 = tpu.matmul %39, %40, %cst_25 {dimension_numbers = #tpu.dot_dimension_numbers<[1], [0], [0], [1], [0, 0, 1, 1], [], []>} : vector<8x32xf32>, vector<32x8xf32>, vector<8x8xf32> -> vector<8x8xf32>
    %c0_26 = arith.constant 0 : index
    %c0_27 = arith.constant 0 : index
    %42 = vector.load %arg7[%c0_26, %c0_27] : memref<1x8xf32, #tpu.memory_space<vmem>>, vector<1x8xf32>
    %43 = vector.broadcast %42 : vector<1x8xf32> to vector<8x8xf32>
    %44 = arith.addf %41, %43 : vector<8x8xf32>
    %45 = vector.extract_strided_slice %44 {offsets = [0, 0], sizes = [2, 8], strides = [1, 1]} : vector<8x8xf32> to vector<2x8xf32>
    %c0_28 = arith.constant 0 : index
    %c0_29 = arith.constant 0 : index
    %46 = vector.load %arg18[%c0_28, %c0_29] : memref<2x8xf32, #tpu.memory_space<vmem>>, vector<2x8xf32>
    tpu.vector_store %arg18[%c0_28, %c0_29], %45 {strides = array<i32>} : memref<2x8xf32, #tpu.memory_space<vmem>>, vector<2x8xf32>,
    %47 = tpu.iota {dimensions = array<i32: 0>} : vector<8x1xi32>
    %c2_i32 = arith.constant 2 : i32
    %48 = vector.broadcast %c2_i32 : i32 to vector<8x1xi32>
    %49 = arith.cmpi slt, %47, %48 : vector<8x1xi32>
    %50 = arith.extui %49 : vector<8x1xi1> to vector<8x1xi32>
    %51 = arith.sitofp %50 : vector<8x1xi32> to vector<8x1xf32>
    %c0_30 = arith.constant 0 : index
    %c0_31 = arith.constant 0 : index
    %52 = vector.load %arg8[%c0_30, %c0_31] : memref<8x32xf32, #tpu.memory_space<vmem>>, vector<8x32xf32>
    %cst_32 = arith.constant dense<0.000000e+00> : vector<8x32xf32>
    %53 = tpu.matmul %44, %52, %cst_32 {dimension_numbers = #tpu.dot_dimension_numbers<[1], [0], [0], [1], [0, 0, 1, 1], [], []>} : vector<8x8xf32>, vector<8x32xf32>, vector<8x32xf32> -> vector<8x32xf32>
    %c0_33 = arith.constant 0 : index
    %c0_34 = arith.constant 0 : index
    %54 = vector.load %arg9[%c0_33, %c0_34] : memref<1x32xf32, #tpu.memory_space<vmem>>, vector<1x32xf32>
    %55 = vector.broadcast %54 : vector<1x32xf32> to vector<8x32xf32>
    %56 = arith.addf %53, %55 : vector<8x32xf32>
    %cst_35 = arith.constant 0.000000e+00 : f32
    %57 = vector.broadcast %cst_35 : f32 to vector<8x32xf32>
    %58 = arith.maximumf %56, %57 : vector<8x32xf32>
    %59 = vector.broadcast %51 : vector<8x1xf32> to vector<8x32xf32>
    %60 = arith.mulf %58, %59 : vector<8x32xf32>
    %c0_36 = arith.constant 0 : index
    %c0_37 = arith.constant 0 : index
    %61 = vector.load %arg10[%c0_36, %c0_37] : memref<160x80xf32, #tpu.memory_space<vmem>>, vector<32x80xf32>
    %cst_38 = arith.constant dense<0.000000e+00> : vector<8x80xf32>
    %62 = tpu.matmul %60, %61, %cst_38 {dimension_numbers = #tpu.dot_dimension_numbers<[1], [0], [0], [1], [0, 0, 1, 1], [], []>} : vector<8x32xf32>, vector<32x80xf32>, vector<8x80xf32> -> vector<8x80xf32>
    %c32 = arith.constant 32 : index
    %c0_39 = arith.constant 0 : index
    %63 = vector.load %arg10[%c32, %c0_39] : memref<160x80xf32, #tpu.memory_space<vmem>>, vector<32x80xf32>
    %cst_40 = arith.constant dense<0.000000e+00> : vector<8x80xf32>
    %64 = tpu.matmul %60, %63, %cst_40 {dimension_numbers = #tpu.dot_dimension_numbers<[1], [0], [0], [1], [0, 0, 1, 1], [], []>} : vector<8x32xf32>, vector<32x80xf32>, vector<8x80xf32> -> vector<8x80xf32>
    %c64 = arith.constant 64 : index
    %c0_41 = arith.constant 0 : index
    %65 = vector.load %arg10[%c64, %c0_41] : memref<160x80xf32, #tpu.memory_space<vmem>>, vector<32x80xf32>
    %cst_42 = arith.constant dense<0.000000e+00> : vector<8x80xf32>
    %66 = tpu.matmul %60, %65, %cst_42 {dimension_numbers = #tpu.dot_dimension_numbers<[1], [0], [0], [1], [0, 0, 1, 1], [], []>} : vector<8x32xf32>, vector<32x80xf32>, vector<8x80xf32> -> vector<8x80xf32>
    %c96 = arith.constant 96 : index
    %c0_43 = arith.constant 0 : index
    %67 = vector.load %arg10[%c96, %c0_43] : memref<160x80xf32, #tpu.memory_space<vmem>>, vector<32x80xf32>
    %cst_44 = arith.constant dense<0.000000e+00> : vector<8x80xf32>
    %68 = tpu.matmul %60, %67, %cst_44 {dimension_numbers = #tpu.dot_dimension_numbers<[1], [0], [0], [1], [0, 0, 1, 1], [], []>} : vector<8x32xf32>, vector<32x80xf32>, vector<8x80xf32> -> vector<8x80xf32>
    %c128 = arith.constant 128 : index
    %c0_45 = arith.constant 0 : index
    %69 = vector.load %arg10[%c128, %c0_45] : memref<160x80xf32, #tpu.memory_space<vmem>>, vector<32x80xf32>
    %cst_46 = arith.constant dense<0.000000e+00> : vector<8x80xf32>
    %70 = tpu.matmul %60, %69, %cst_46 {dimension_numbers = #tpu.dot_dimension_numbers<[1], [0], [0], [1], [0, 0, 1, 1], [], []>} : vector<8x32xf32>, vector<32x80xf32>, vector<8x80xf32> -> vector<8x80xf32>
    %71 = tpu.concatenate %62, %64, %66, %68, %70 in 0 : vector<8x80xf32>, vector<8x80xf32>, vector<8x80xf32>, vector<8x80xf32>, vector<8x80xf32> -> vector<40x80xf32>
    %c0_47 = arith.constant 0 : index
    %c0_48 = arith.constant 0 : index
    %72 = vector.load %arg11[%c0_47, %c0_48] : memref<1x80xf32, #tpu.memory_space<vmem>>, vector<1x80xf32>
    %73 = vector.broadcast %72 : vector<1x80xf32> to vector<40x80xf32>
    %74 = arith.addf %71, %73 : vector<40x80xf32>
    %cst_49 = arith.constant 0.000000e+00 : f32
    %75 = vector.broadcast %cst_49 : f32 to vector<40x80xf32>
    %76 = arith.maximumf %74, %75 : vector<40x80xf32>
    %c0_50 = arith.constant 0 : index
    %c0_51 = arith.constant 0 : index
    %77 = vector.load %arg12[%c0_50, %c0_51] : memref<400x120xf32, #tpu.memory_space<vmem>>, vector<80x120xf32>
    %cst_52 = arith.constant dense<0.000000e+00> : vector<40x120xf32>
    %78 = tpu.matmul %76, %77, %cst_52 {dimension_numbers = #tpu.dot_dimension_numbers<[1], [0], [0], [1], [0, 0, 1, 1], [], []>} : vector<40x80xf32>, vector<80x120xf32>, vector<40x120xf32> -> vector<40x120xf32>
    %c80_53 = arith.constant 80 : index
    %c0_54 = arith.constant 0 : index
    %79 = vector.load %arg12[%c80_53, %c0_54] : memref<400x120xf32, #tpu.memory_space<vmem>>, vector<80x120xf32>
    %cst_55 = arith.constant dense<0.000000e+00> : vector<40x120xf32>
    %80 = tpu.matmul %76, %79, %cst_55 {dimension_numbers = #tpu.dot_dimension_numbers<[1], [0], [0], [1], [0, 0, 1, 1], [], []>} : vector<40x80xf32>, vector<80x120xf32>, vector<40x120xf32> -> vector<40x120xf32>
    %c160_56 = arith.constant 160 : index
    %c0_57 = arith.constant 0 : index
    %81 = vector.load %arg12[%c160_56, %c0_57] : memref<400x120xf32, #tpu.memory_space<vmem>>, vector<80x120xf32>
    %cst_58 = arith.constant dense<0.000000e+00> : vector<40x120xf32>
    %82 = tpu.matmul %76, %81, %cst_58 {dimension_numbers = #tpu.dot_dimension_numbers<[1], [0], [0], [1], [0, 0, 1, 1], [], []>} : vector<40x80xf32>, vector<80x120xf32>, vector<40x120xf32> -> vector<40x120xf32>
    %c240_59 = arith.constant 240 : index
    %c0_60 = arith.constant 0 : index
    %83 = vector.load %arg12[%c240_59, %c0_60] : memref<400x120xf32, #tpu.memory_space<vmem>>, vector<80x120xf32>
    %cst_61 = arith.constant dense<0.000000e+00> : vector<40x120xf32>
    %84 = tpu.matmul %76, %83, %cst_61 {dimension_numbers = #tpu.dot_dimension_numbers<[1], [0], [0], [1], [0, 0, 1, 1], [], []>} : vector<40x80xf32>, vector<80x120xf32>, vector<40x120xf32> -> vector<40x120xf32>
    %c320_62 = arith.constant 320 : index
    %c0_63 = arith.constant 0 : index
    %85 = vector.load %arg12[%c320_62, %c0_63] : memref<400x120xf32, #tpu.memory_space<vmem>>, vector<80x120xf32>
    %cst_64 = arith.constant dense<0.000000e+00> : vector<40x120xf32>
    %86 = tpu.matmul %76, %85, %cst_64 {dimension_numbers = #tpu.dot_dimension_numbers<[1], [0], [0], [1], [0, 0, 1, 1], [], []>} : vector<40x80xf32>, vector<80x120xf32>, vector<40x120xf32> -> vector<40x120xf32>
    %87 = tpu.concatenate %78, %80, %82, %84, %86 in 0 : vector<40x120xf32>, vector<40x120xf32>, vector<40x120xf32>, vector<40x120xf32>, vector<40x120xf32> -> vector<200x120xf32>
    %c0_65 = arith.constant 0 : index
    %c0_66 = arith.constant 0 : index
    %88 = vector.load %arg14[%c0_65, %c0_66] : memref<32x200xf32, #tpu.memory_space<vmem>>, vector<32x200xf32>
    %cst_67 = arith.constant dense<0.000000e+00> : vector<32x120xf32>
    %89 = tpu.matmul %88, %87, %cst_67 {dimension_numbers = #tpu.dot_dimension_numbers<[1], [0], [0], [1], [0, 0, 1, 1], [], []>} : vector<32x200xf32>, vector<200x120xf32>, vector<32x120xf32> -> vector<32x120xf32>
    %c0_68 = arith.constant 0 : index
    %c0_69 = arith.constant 0 : index
    %90 = vector.load %arg13[%c0_68, %c0_69] : memref<1x120xf32, #tpu.memory_space<vmem>>, vector<1x120xf32>
    %91 = vector.broadcast %90 : vector<1x120xf32> to vector<32x120xf32>
    %92 = arith.addf %89, %91 : vector<32x120xf32>
    %93 = tpu.iota {dimensions = array<i32: 0>} : vector<32x1xi32>
    %c16_i32 = arith.constant 16 : i32
    %c0_i32 = arith.constant 0 : i32
    %94 = arith.cmpi eq, %c16_i32, %c0_i32 : i32
    %c1_i32 = arith.constant 1 : i32
    %95 = arith.select %94, %c1_i32, %c16_i32 : i32
    %96 = vector.broadcast %95 : i32 to vector<32x1xi32>
    %97 = arith.remsi %93, %96 : vector<32x1xi32>
    %c0_i32_70 = arith.constant 0 : i32
    %98 = vector.broadcast %c0_i32_70 : i32 to vector<32x1xi32>
    %99 = arith.cmpi ne, %97, %98 : vector<32x1xi32>
    %c0_i32_71 = arith.constant 0 : i32
    %100 = vector.broadcast %c0_i32_71 : i32 to vector<32x1xi32>
    %101 = arith.cmpi slt, %97, %100 : vector<32x1xi32>
    %c0_i32_72 = arith.constant 0 : i32
    %102 = arith.cmpi slt, %95, %c0_i32_72 : i32
    %103 = vector.broadcast %102 : i1 to vector<32x1xi1>
    %104 = vector.broadcast %103 : vector<32x1xi1> to vector<32x1xi1>
    %105 = arith.xori %101, %104 : vector<32x1xi1>
    %106 = arith.andi %105, %99 : vector<32x1xi1>
    %107 = vector.broadcast %95 : i32 to vector<32x1xi32>
    %108 = arith.addi %97, %107 : vector<32x1xi32>
    %109 = arith.select %106, %108, %97 : vector<32x1xi1>, vector<32x1xi32>
    %c15_i32 = arith.constant 15 : i32
    %110 = vector.broadcast %c15_i32 : i32 to vector<32x1xi32>
    %111 = arith.cmpi slt, %109, %110 : vector<32x1xi32>
    %cst_73 = arith.constant 0.000000e+00 : f32
    %112 = vector.broadcast %cst_73 : f32 to vector<32x120xf32>
    %113 = arith.maximumf %92, %112 : vector<32x120xf32>
    %114 = arith.extui %111 : vector<32x1xi1> to vector<32x1xi32>
    %115 = arith.sitofp %114 : vector<32x1xi32> to vector<32x1xf32>
    %116 = vector.broadcast %115 : vector<32x1xf32> to vector<32x120xf32>
    %117 = arith.mulf %113, %116 : vector<32x120xf32>
    %c0_74 = arith.constant 0 : index
    %c0_75 = arith.constant 0 : index
    %118 = vector.load %arg15[%c0_74, %c0_75] : memref<480x192xf32, #tpu.memory_space<vmem>>, vector<120x192xf32>
    %cst_76 = arith.constant dense<0.000000e+00> : vector<32x192xf32>
    %119 = tpu.matmul %117, %118, %cst_76 {dimension_numbers = #tpu.dot_dimension_numbers<[1], [0], [0], [1], [0, 0, 1, 1], [], []>} : vector<32x120xf32>, vector<120x192xf32>, vector<32x192xf32> -> vector<32x192xf32>
    %c120 = arith.constant 120 : index
    %c0_77 = arith.constant 0 : index
    %120 = vector.load %arg15[%c120, %c0_77] : memref<480x192xf32, #tpu.memory_space<vmem>>, vector<120x192xf32>
    %cst_78 = arith.constant dense<0.000000e+00> : vector<32x192xf32>
    %121 = tpu.matmul %117, %120, %cst_78 {dimension_numbers = #tpu.dot_dimension_numbers<[1], [0], [0], [1], [0, 0, 1, 1], [], []>} : vector<32x120xf32>, vector<120x192xf32>, vector<32x192xf32> -> vector<32x192xf32>
    %c240_79 = arith.constant 240 : index
    %c0_80 = arith.constant 0 : index
    %122 = vector.load %arg15[%c240_79, %c0_80] : memref<480x192xf32, #tpu.memory_space<vmem>>, vector<120x192xf32>
    %cst_81 = arith.constant dense<0.000000e+00> : vector<32x192xf32>
    %123 = tpu.matmul %117, %122, %cst_81 {dimension_numbers = #tpu.dot_dimension_numbers<[1], [0], [0], [1], [0, 0, 1, 1], [], []>} : vector<32x120xf32>, vector<120x192xf32>, vector<32x192xf32> -> vector<32x192xf32>
    %c360 = arith.constant 360 : index
    %c0_82 = arith.constant 0 : index
    %124 = vector.load %arg15[%c360, %c0_82] : memref<480x192xf32, #tpu.memory_space<vmem>>, vector<120x192xf32>
    %cst_83 = arith.constant dense<0.000000e+00> : vector<32x192xf32>
    %125 = tpu.matmul %117, %124, %cst_83 {dimension_numbers = #tpu.dot_dimension_numbers<[1], [0], [0], [1], [0, 0, 1, 1], [], []>} : vector<32x120xf32>, vector<120x192xf32>, vector<32x192xf32> -> vector<32x192xf32>
    %126 = tpu.concatenate %119, %121, %123, %125 in 0 : vector<32x192xf32>, vector<32x192xf32>, vector<32x192xf32>, vector<32x192xf32> -> vector<128x192xf32>
    %c0_84 = arith.constant 0 : index
    %c0_85 = arith.constant 0 : index
    %127 = vector.load %arg17[%c0_84, %c0_85] : memref<32x128xf32, #tpu.memory_space<vmem>>, vector<32x128xf32>
    %cst_86 = arith.constant dense<0.000000e+00> : vector<32x192xf32>
    %128 = tpu.matmul %127, %126, %cst_86 {dimension_numbers = #tpu.dot_dimension_numbers<[1], [0], [0], [1], [0, 0, 1, 1], [], []>} : vector<32x128xf32>, vector<128x192xf32>, vector<32x192xf32> -> vector<32x192xf32>
    %c0_87 = arith.constant 0 : index
    %c0_88 = arith.constant 0 : index
    %129 = vector.load %arg16[%c0_87, %c0_88] : memref<1x192xf32, #tpu.memory_space<vmem>>, vector<1x192xf32>
    %130 = vector.broadcast %129 : vector<1x192xf32> to vector<32x192xf32>
    %131 = arith.addf %128, %130 : vector<32x192xf32>
    %c0_89 = arith.constant 0 : index
    %c0_90 = arith.constant 0 : index
    %132 = vector.load %arg19[%c0_89, %c0_90] : memref<32x192xf32, #tpu.memory_space<vmem>>, vector<32x192xf32>
    tpu.vector_store %arg19[%c0_89, %c0_90], %131 {strides = array<i32>} : memref<32x192xf32, #tpu.memory_space<vmem>>, vector<32x192xf32>,
    return
  }
}

</mosaic_0001>

<llo_original>
// kernel: forward.1
$region0: #{forward.1}
  #allocation0 [shape = 'u32[]', space=smem, size = 0x4, offset = 0x4, fixed_abs, tag = 'smem constant byte address 0x4 - core index']
  #allocation1 [shape = 'u32[72,128]{1,0:T(1,128)}', space=vmem, size = 0x9000, scoped, tag = 'internal scratch']
  %s0 = inlined_call_operand.vmem [shape: f32[64,160], index: 0, kind: input, shape index: {}]
  %s1 = inlined_call_operand.vmem [shape: f32[160,80], index: 1, kind: input, shape index: {}]
  %s2 = inlined_call_operand.vmem [shape: f32[1,80], index: 2, kind: input, shape index: {}]
  %s3 = inlined_call_operand.vmem [shape: f32[400,128], index: 3, kind: input, shape index: {}]
  %s4 = inlined_call_operand.vmem [shape: f32[1,128], index: 4, kind: input, shape index: {}]
  %s5 = inlined_call_operand.vmem [shape: f32[8,80], index: 5, kind: input, shape index: {}]
  %s6 = inlined_call_operand.vmem [shape: f32[32,8], index: 6, kind: input, shape index: {}]
  %s7 = inlined_call_operand.vmem [shape: f32[1,8], index: 7, kind: input, shape index: {}]
  %s8 = inlined_call_operand.vmem [shape: f32[8,32], index: 8, kind: input, shape index: {}]
  %s9 = inlined_call_operand.vmem [shape: f32[1,32], index: 9, kind: input, shape index: {}]
  %s10 = inlined_call_operand.vmem [shape: f32[160,80], index: 10, kind: input, shape index: {}]
  %s11 = inlined_call_operand.vmem [shape: f32[1,80], index: 11, kind: input, shape index: {}]
  %s12 = inlined_call_operand.vmem [shape: f32[400,120], index: 12, kind: input, shape index: {}]
  %s13 = inlined_call_operand.vmem [shape: f32[1,120], index: 13, kind: input, shape index: {}]
  %s14 = inlined_call_operand.vmem [shape: f32[32,200], index: 14, kind: input, shape index: {}]
  %s15 = inlined_call_operand.vmem [shape: f32[480,192], index: 15, kind: input, shape index: {}]
  %s16 = inlined_call_operand.vmem [shape: f32[1,192], index: 16, kind: input, shape index: {}]
  %s17 = inlined_call_operand.vmem [shape: f32[32,128], index: 17, kind: input, shape index: {}]
  %s18 = inlined_call_operand.hbm [shape: f32[2,8], index: 18, kind: output, shape index: {0}]
  %s19 = inlined_call_operand.vmem [shape: f32[32,192], index: 19, kind: output, shape index: {1}]
  %20 = xla_tuple %s18, %s19
  %s21 = sld [smem:[#allocation0]]
  $region90: #{forward.1} parent=0
    _
  %s23 = ssub.s32 1, %s21
  %s24 = scalar_select 0, %s23, %s21
  $region1: #{forward.1} parent=0
    #allocation2 [shape = 'u8[1024]{0}', space=vmem, size = 0x400, scoped, tag = 'output window, operand 0, single buffered']
    #allocation3 [shape = 's32[1]{0}', space=sflag, size = 0x4, scoped, tag = 'scoped memory for forward.1']
    %25 = vsyncpa [#allocation3], 0
    // Predicated region
    $region2: #{forward.1} parent=1 // pred_check
      _
    $region3: #{forward.1} parent=1 // pred_check_branch
      %27 = sbr.rel (0) target = $region5
    $region4: #{forward.1} parent=1 // pred_region
      _
    $region5: #{forward.1} parent=1 // pred_fallthru
      _
    // Predicated region
    $region6: #{forward.1} parent=1 // pred_check
      _
    $region7: #{forward.1} parent=1 // pred_check_branch
      %29 = sbr.rel (0) target = $region9
    $region8: #{forward.1} parent=1 // pred_region
      _
    $region9: #{forward.1} parent=1 // pred_fallthru
      _
    // Predicated region
    $region10: #{forward.1} parent=1 // pred_check
      _
    $region11: #{forward.1} parent=1 // pred_check_branch
      %31 = sbr.rel (0) target = $region13
    $region12: #{forward.1} parent=1 // pred_region
      _
    $region13: #{forward.1} parent=1 // pred_fallthru
      _
    // Predicated region
    $region14: #{forward.1} parent=1 // pred_check
      _
    $region15: #{forward.1} parent=1 // pred_check_branch
      %33 = sbr.rel (0) target = $region17
    $region16: #{forward.1} parent=1 // pred_region
      _
    $region17: #{forward.1} parent=1 // pred_fallthru
      _
    // Predicated region
    $region18: #{forward.1} parent=1 // pred_check
      _
    $region19: #{forward.1} parent=1 // pred_check_branch
      %35 = sbr.rel (0) target = $region21
    $region20: #{forward.1} parent=1 // pred_region
      _
    $region21: #{forward.1} parent=1 // pred_fallthru
      _
    // Predicated region
    $region22: #{forward.1} parent=1 // pred_check
      _
    $region23: #{forward.1} parent=1 // pred_check_branch
      %37 = sbr.rel (0) target = $region25
    $region24: #{forward.1} parent=1 // pred_region
      _
    $region25: #{forward.1} parent=1 // pred_fallthru
      _
    // Predicated region
    $region26: #{forward.1} parent=1 // pred_check
      _
    $region27: #{forward.1} parent=1 // pred_check_branch
      %39 = sbr.rel (0) target = $region29
    $region28: #{forward.1} parent=1 // pred_region
      _
    $region29: #{forward.1} parent=1 // pred_fallthru
      _
    // Predicated region
    $region30: #{forward.1} parent=1 // pred_check
      _
    $region31: #{forward.1} parent=1 // pred_check_branch
      %41 = sbr.rel (0) target = $region33
    $region32: #{forward.1} parent=1 // pred_region
      _
    $region33: #{forward.1} parent=1 // pred_fallthru
      _
    // Predicated region
    $region34: #{forward.1} parent=1 // pred_check
      _
    $region35: #{forward.1} parent=1 // pred_check_branch
      %43 = sbr.rel (0) target = $region37
    $region36: #{forward.1} parent=1 // pred_region
      _
    $region37: #{forward.1} parent=1 // pred_fallthru
      _
    // Predicated region
    $region38: #{forward.1} parent=1 // pred_check
      _
    $region39: #{forward.1} parent=1 // pred_check_branch
      %45 = sbr.rel (0) target = $region41
    $region40: #{forward.1} parent=1 // pred_region
      _
    $region41: #{forward.1} parent=1 // pred_fallthru
      _
    // Predicated region
    $region42: #{forward.1} parent=1 // pred_check
      _
    $region43: #{forward.1} parent=1 // pred_check_branch
      %47 = sbr.rel (0) target = $region45
    $region44: #{forward.1} parent=1 // pred_region
      _
    $region45: #{forward.1} parent=1 // pred_fallthru
      _
    // Predicated region
    $region46: #{forward.1} parent=1 // pred_check
      _
    $region47: #{forward.1} parent=1 // pred_check_branch
      %49 = sbr.rel (0) target = $region49
    $region48: #{forward.1} parent=1 // pred_region
      _
    $region49: #{forward.1} parent=1 // pred_fallthru
      _
    // Predicated region
    $region50: #{forward.1} parent=1 // pred_check
      _
    $region51: #{forward.1} parent=1 // pred_check_branch
      %51 = sbr.rel (0) target = $region53
    $region52: #{forward.1} parent=1 // pred_region
      _
    $region53: #{forward.1} parent=1 // pred_fallthru
      _
    // Predicated region
    $region54: #{forward.1} parent=1 // pred_check
      _
    $region55: #{forward.1} parent=1 // pred_check_branch
      %53 = sbr.rel (0) target = $region57
    $region56: #{forward.1} parent=1 // pred_region
      _
    $region57: #{forward.1} parent=1 // pred_fallthru
      _
    // Predicated region
    $region58: #{forward.1} parent=1 // pred_check
      _
    $region59: #{forward.1} parent=1 // pred_check_branch
      %55 = sbr.rel (0) target = $region61
    $region60: #{forward.1} parent=1 // pred_region
      _
    $region61: #{forward.1} parent=1 // pred_fallthru
      _
    // Predicated region
    $region62: #{forward.1} parent=1 // pred_check
      _
    $region63: #{forward.1} parent=1 // pred_check_branch
      %57 = sbr.rel (0) target = $region65
    $region64: #{forward.1} parent=1 // pred_region
      _
    $region65: #{forward.1} parent=1 // pred_fallthru
      _
    // Predicated region
    $region66: #{forward.1} parent=1 // pred_check
      _
    $region67: #{forward.1} parent=1 // pred_check_branch
      %59 = sbr.rel (0) target = $region69
    $region68: #{forward.1} parent=1 // pred_region
      _
    $region69: #{forward.1} parent=1 // pred_fallthru
      _
    // Predicated region
    $region70: #{forward.1} parent=1 // pred_check
      _
    $region71: #{forward.1} parent=1 // pred_check_branch
      %61 = sbr.rel (0) target = $region73
    $region72: #{forward.1} parent=1 // pred_region
      _
    $region73: #{forward.1} parent=1 // pred_fallthru
      _
    %v62 = vld [vmem:[%s0] sm:$0xff]
    %v63 = vld [vmem:[%s0 + $0x8] sm:$0xff]
    %v64 = vld [vmem:[%s0 + $0x10] sm:$0xff]
    %v65 = vld [vmem:[%s0 + $0x18] sm:$0xff]
    %v66 = vld [vmem:[%s0 + $0x20] sm:$0xff]
    %v67 = vld [vmem:[%s0 + $0x28] sm:$0xff]
    %v68 = vld [vmem:[%s0 + $0x30] sm:$0xff]
    %v69 = vld [vmem:[%s0 + $0x38] sm:$0xff]
    %v70 = vld [vmem:[%s0 + $0x40] sm:$0xff]
    %v71 = vld [vmem:[%s0 + $0x48] sm:$0xff]
    %v72 = vld [vmem:[%s0 + $0x50] sm:$0xff]
    %v73 = vld [vmem:[%s0 + $0x58] sm:$0xff]
    %v74 = vld [vmem:[%s0 + $0x60] sm:$0xff]
    %v75 = vld [vmem:[%s0 + $0x68] sm:$0xff]
    %v76 = vld [vmem:[%s0 + $0x70] sm:$0xff]
    %v77 = vld [vmem:[%s0 + $0x78] sm:$0xff]
    %v78 = vld [vmem:[%s1] sm:$0xff]
    %v79 = vld [vmem:[%s1 + $0x8] sm:$0xff]
    %v80 = vld [vmem:[%s1 + $0x10] sm:$0xff]
    %v81 = vld [vmem:[%s1 + $0x18] sm:$0xff]
    %v82 = vld [vmem:[%s1 + $0x20] sm:$0xff]
    %v83 = vld [vmem:[%s1 + $0x28] sm:$0xff]
    %v84 = vld [vmem:[%s1 + $0x30] sm:$0xff]
    %v85 = vld [vmem:[%s1 + $0x38] sm:$0xff]
    %v86 = vld [vmem:[%s1 + $0x40] sm:$0xff]
    %v87 = vld [vmem:[%s1 + $0x48] sm:$0xff]
    %v88 = vld [vmem:[%s1 + $0x50] sm:$0xff]
    %v89 = vld [vmem:[%s1 + $0x58] sm:$0xff]
    %v90 = vld [vmem:[%s1 + $0x60] sm:$0xff]
    %v91 = vld [vmem:[%s1 + $0x68] sm:$0xff]
    %v92 = vld [vmem:[%s1 + $0x70] sm:$0xff]
    %v93 = vld [vmem:[%s1 + $0x78] sm:$0xff]
    %v94 = vld [vmem:[%s1 + $0x80] sm:$0xff]
    %v95 = vld [vmem:[%s1 + $0x88] sm:$0xff]
    %v96 = vld [vmem:[%s1 + $0x90] sm:$0xff]
    %v97 = vld [vmem:[%s1 + $0x98] sm:$0xff]
    %v98 = vld [vmem:[%s2] sm:$0x1]
    %v100 = vperm.slane %v98, 0
    %vm102 = vcmask 261120
    %v104 = vsel %vm102, %v63, 0
    %v107 = vsel %vm102, %v65, 0
    %v110 = vsel %vm102, %v67, 0
    %v113 = vsel %vm102, %v69, 0
    %v116 = vsel %vm102, %v71, 0
    %v119 = vsel %vm102, %v73, 0
    %v122 = vsel %vm102, %v75, 0
    %v125 = vsel %vm102, %v77, 0
    %127 = vmatpush.msra.mxu0 %v93
    %128 = vmatpush.msra.mxu0 %v92
    %129 = vmatpush.msra.mxu0 %v91
    %130 = vmatpush.msra.mxu0 %v90
    %131 = vmatpush.msra.mxu0 %v89
    %132 = vmatpush.msra.mxu0 %v88
    %133 = vmatpush.msra.mxu0 %v87
    %134 = vmatpush.msra.mxu0 %v86
    %135 = vmatpush.msra.mxu0 %v85
    %136 = vmatpush.msra.mxu0 %v84
    %137 = vmatpush.msra.mxu0 %v83
    %138 = vmatpush.msra.mxu0 %v82
    %139 = vmatpush.msra.mxu0 %v81
    %140 = vmatpush.msra.mxu0 %v80
    %141 = vmatpush.msra.mxu0 %v79
    %142 = vmatpush.msra.mxu0 %v78
    %143 = vmatmul.f32.gmra.mxu0 %v62
    %v144 = vpop.f32.mrf.mxu0
    %v145 = vadd.f32 %v100, %v144
    %146 = vmatmul.f32.gmra.mxu0 %v64
    %v147 = vpop.f32.mrf.mxu0
    %v148 = vadd.f32 %v100, %v147
    %149 = vmatmul.f32.gmra.mxu0 %v66
    %v150 = vpop.f32.mrf.mxu0
    %v151 = vadd.f32 %v100, %v150
    %152 = vmatmul.f32.gmra.mxu0 %v68
    %v153 = vpop.f32.mrf.mxu0
    %v154 = vadd.f32 %v100, %v153
    %155 = vmatmul.f32.gmra.mxu0 %v70
    %v156 = vpop.f32.mrf.mxu0
    %v157 = vadd.f32 %v100, %v156
    %158 = vmatmul.f32.gmra.mxu0 %v72
    %v159 = vpop.f32.mrf.mxu0
    %v160 = vadd.f32 %v100, %v159
    %161 = vmatmul.f32.gmra.mxu0 %v74
    %v162 = vpop.f32.mrf.mxu0
    %v163 = vadd.f32 %v100, %v162
    %164 = vmatmul.f32.gmra.mxu0 %v76
    %v165 = vpop.f32.mrf.mxu0
    %v166 = vadd.f32 %v100, %v165
    %167 = vdwg.mxu0
    %168 = vmatpush.msra.mxu0 0.0
    %169 = vmatpush.msra.mxu0 0.0
    %170 = vmatpush.msra.mxu0 0.0
    %171 = vmatpush.msra.mxu0 0.0
    %172 = vmatpush.msra.mxu0 0.0
    %173 = vmatpush.msra.mxu0 0.0
    %174 = vmatpush.msra.mxu0 0.0
    %175 = vmatpush.msra.mxu0 0.0
    %176 = vmatpush.msra.mxu0 0.0
    %177 = vmatpush.msra.mxu0 0.0
    %178 = vmatpush.msra.mxu0 0.0
    %179 = vmatpush.msra.mxu0 0.0
    %180 = vmatpush.msra.mxu0 %v97
    %181 = vmatpush.msra.mxu0 %v96
    %182 = vmatpush.msra.mxu0 %v95
    %183 = vmatpush.msra.mxu0 %v94
    %184 = vmatmul.f32.gmra.mxu0 %v104
    %v185 = vpop.f32.mrf.mxu0
    %v186 = vadd.f32 %v145, %v185
    %187 = vmatmul.f32.gmra.mxu0 %v107
    %v188 = vpop.f32.mrf.mxu0
    %v189 = vadd.f32 %v148, %v188
    %190 = vmatmul.f32.gmra.mxu0 %v110
    %v191 = vpop.f32.mrf.mxu0
    %v192 = vadd.f32 %v151, %v191
    %193 = vmatmul.f32.gmra.mxu0 %v113
    %v194 = vpop.f32.mrf.mxu0
    %v195 = vadd.f32 %v154, %v194
    %196 = vmatmul.f32.gmra.mxu0 %v116
    %v197 = vpop.f32.mrf.mxu0
    %v198 = vadd.f32 %v157, %v197
    %199 = vmatmul.f32.gmra.mxu0 %v119
    %v200 = vpop.f32.mrf.mxu0
    %v201 = vadd.f32 %v160, %v200
    %202 = vmatmul.f32.gmra.mxu0 %v122
    %v203 = vpop.f32.mrf.mxu0
    %v204 = vadd.f32 %v163, %v203
    %205 = vmatmul.f32.gmra.mxu0 %v125
    %v206 = vpop.f32.mrf.mxu0
    %v207 = vadd.f32 %v166, %v206
    %208 = vdwg.mxu0
    %v209 = vmax.f32 %v186, 0.0
    %v210 = vmax.f32 %v189, 0.0
    %v211 = vmax.f32 %v192, 0.0
    %v212 = vmax.f32 %v195, 0.0
    %v213 = vmax.f32 %v198, 0.0
    %v214 = vmax.f32 %v201, 0.0
    %v215 = vmax.f32 %v204, 0.0
    %v216 = vmax.f32 %v207, 0.0
    %v217 = vmax.f32 %v209, %v211
    %v218 = vmax.f32 %v210, %v212
    %v219 = vmax.f32 %v213, %v215
    %v220 = vmax.f32 %v214, %v216
    %v221 = vmax.f32 %v217, %v219
    %v222 = vmax.f32 %v218, %v220
    %v223 = vld [vmem:[%s3] sm:$0xff]
    %v224 = vld [vmem:[%s3 + $0x8] sm:$0xff]
    %v225 = vld [vmem:[%s3 + $0x10] sm:$0xff]
    %v226 = vld [vmem:[%s3 + $0x18] sm:$0xff]
    %v227 = vld [vmem:[%s3 + $0x20] sm:$0xff]
    %v228 = vld [vmem:[%s3 + $0x28] sm:$0xff]
    %v229 = vld [vmem:[%s3 + $0x30] sm:$0xff]
    %v230 = vld [vmem:[%s3 + $0x38] sm:$0xff]
    %v231 = vld [vmem:[%s3 + $0x40] sm:$0xff]
    %v232 = vld [vmem:[%s3 + $0x48] sm:$0xff]
    %vm233 = vcmask 654336
    %v235 = vsel %vm233, %v221, 0
    %v238 = vsel %vm233, %v222, 0
    %240 = vmatpush.msra.mxu0 0.0
    %241 = vmatpush.msra.mxu0 0.0
    %242 = vmatpush.msra.mxu0 0.0
    %243 = vmatpush.msra.mxu0 0.0
    %244 = vmatpush.msra.mxu0 0.0
    %245 = vmatpush.msra.mxu0 0.0
    %246 = vmatpush.msra.mxu0 %v232
    %247 = vmatpush.msra.mxu0 %v231
    %248 = vmatpush.msra.mxu0 %v230
    %249 = vmatpush.msra.mxu0 %v229
    %250 = vmatpush.msra.mxu0 %v228
    %251 = vmatpush.msra.mxu0 %v227
    %252 = vmatpush.msra.mxu0 %v226
    %253 = vmatpush.msra.mxu0 %v225
    %254 = vmatpush.msra.mxu0 %v224
    %255 = vmatpush.msra.mxu0 %v223
    %256 = vmatmul.f32.gmra.mxu0 %v235
    %v257 = vpop.f32.mrf.mxu0
    %v258 = vadd.f32 0.0, %v257
    %259 = vmatmul.f32.gmra.mxu0 %v238
    %v260 = vpop.f32.mrf.mxu0
    %v261 = vadd.f32 0.0, %v260
    %262 = vdwg.mxu0
    %v263 = vld [vmem:[%s3 + $0x50] sm:$0xff]
    %v264 = vld [vmem:[%s3 + $0x58] sm:$0xff]
    %v265 = vld [vmem:[%s3 + $0x60] sm:$0xff]
    %v266 = vld [vmem:[%s3 + $0x68] sm:$0xff]
    %v267 = vld [vmem:[%s3 + $0x70] sm:$0xff]
    %v268 = vld [vmem:[%s3 + $0x78] sm:$0xff]
    %v269 = vld [vmem:[%s3 + $0x80] sm:$0xff]
    %v270 = vld [vmem:[%s3 + $0x88] sm:$0xff]
    %v271 = vld [vmem:[%s3 + $0x90] sm:$0xff]
    %v272 = vld [vmem:[%s3 + $0x98] sm:$0xff]
    %273 = vmatpush.msra.mxu0 0.0
    %274 = vmatpush.msra.mxu0 0.0
    %275 = vmatpush.msra.mxu0 0.0
    %276 = vmatpush.msra.mxu0 0.0
    %277 = vmatpush.msra.mxu0 0.0
    %278 = vmatpush.msra.mxu0 0.0
    %279 = vmatpush.msra.mxu0 %v272
    %280 = vmatpush.msra.mxu0 %v271
    %281 = vmatpush.msra.mxu0 %v270
    %282 = vmatpush.msra.mxu0 %v269
    %283 = vmatpush.msra.mxu0 %v268
    %284 = vmatpush.msra.mxu0 %v267
    %285 = vmatpush.msra.mxu0 %v266
    %286 = vmatpush.msra.mxu0 %v265
    %287 = vmatpush.msra.mxu0 %v264
    %288 = vmatpush.msra.mxu0 %v263
    %289 = vmatmul.f32.gmra.mxu0 %v235
    %v290 = vpop.f32.mrf.mxu0
    %v291 = vadd.f32 0.0, %v290
    %292 = vmatmul.f32.gmra.mxu0 %v238
    %v293 = vpop.f32.mrf.mxu0
    %v294 = vadd.f32 0.0, %v293
    %295 = vdwg.mxu0
    %v296 = vld [vmem:[%s3 + $0xa0] sm:$0xff]
    %v297 = vld [vmem:[%s3 + $0xa8] sm:$0xff]
    %v298 = vld [vmem:[%s3 + $0xb0] sm:$0xff]
    %v299 = vld [vmem:[%s3 + $0xb8] sm:$0xff]
    %v300 = vld [vmem:[%s3 + $0xc0] sm:$0xff]
    %v301 = vld [vmem:[%s3 + $0xc8] sm:$0xff]
    %v302 = vld [vmem:[%s3 + $0xd0] sm:$0xff]
    %v303 = vld [vmem:[%s3 + $0xd8] sm:$0xff]
    %v304 = vld [vmem:[%s3 + $0xe0] sm:$0xff]
    %v305 = vld [vmem:[%s3 + $0xe8] sm:$0xff]
    %306 = vmatpush.msra.mxu0 0.0
    %307 = vmatpush.msra.mxu0 0.0
    %308 = vmatpush.msra.mxu0 0.0
    %309 = vmatpush.msra.mxu0 0.0
    %310 = vmatpush.msra.mxu0 0.0
    %311 = vmatpush.msra.mxu0 0.0
    %312 = vmatpush.msra.mxu0 %v305
    %313 = vmatpush.msra.mxu0 %v304
    %314 = vmatpush.msra.mxu0 %v303
    %315 = vmatpush.msra.mxu0 %v302
    %316 = vmatpush.msra.mxu0 %v301
    %317 = vmatpush.msra.mxu0 %v300
    %318 = vmatpush.msra.mxu0 %v299
    %319 = vmatpush.msra.mxu0 %v298
    %320 = vmatpush.msra.mxu0 %v297
    %321 = vmatpush.msra.mxu0 %v296
    %322 = vmatmul.f32.gmra.mxu0 %v235
    %v323 = vpop.f32.mrf.mxu0
    %v324 = vadd.f32 0.0, %v323
    %325 = vmatmul.f32.gmra.mxu0 %v238
    %v326 = vpop.f32.mrf.mxu0
    %v327 = vadd.f32 0.0, %v326
    %328 = vdwg.mxu0
    %v329 = vld [vmem:[%s3 + $0xf0] sm:$0xff]
    %v330 = vld [vmem:[%s3 + $0xf8] sm:$0xff]
    %v331 = vld [vmem:[%s3 + $0x100] sm:$0xff]
    %v332 = vld [vmem:[%s3 + $0x108] sm:$0xff]
    %v333 = vld [vmem:[%s3 + $0x110] sm:$0xff]
    %v334 = vld [vmem:[%s3 + $0x118] sm:$0xff]
    %v335 = vld [vmem:[%s3 + $0x120] sm:$0xff]
    %v336 = vld [vmem:[%s3 + $0x128] sm:$0xff]
    %v337 = vld [vmem:[%s3 + $0x130] sm:$0xff]
    %v338 = vld [vmem:[%s3 + $0x138] sm:$0xff]
    %339 = vmatpush.msra.mxu0 0.0
    %340 = vmatpush.msra.mxu0 0.0
    %341 = vmatpush.msra.mxu0 0.0
    %342 = vmatpush.msra.mxu0 0.0
    %343 = vmatpush.msra.mxu0 0.0
    %344 = vmatpush.msra.mxu0 0.0
    %345 = vmatpush.msra.mxu0 %v338
    %346 = vmatpush.msra.mxu0 %v337
    %347 = vmatpush.msra.mxu0 %v336
    %348 = vmatpush.msra.mxu0 %v335
    %349 = vmatpush.msra.mxu0 %v334
    %350 = vmatpush.msra.mxu0 %v333
    %351 = vmatpush.msra.mxu0 %v332
    %352 = vmatpush.msra.mxu0 %v331
    %353 = vmatpush.msra.mxu0 %v330
    %354 = vmatpush.msra.mxu0 %v329
    %355 = vmatmul.f32.gmra.mxu0 %v235
    %v356 = vpop.f32.mrf.mxu0
    %v357 = vadd.f32 0.0, %v356
    %358 = vmatmul.f32.gmra.mxu0 %v238
    %v359 = vpop.f32.mrf.mxu0
    %v360 = vadd.f32 0.0, %v359
    %361 = vdwg.mxu0
    %v362 = vld [vmem:[%s3 + $0x140] sm:$0xff]
    %v363 = vld [vmem:[%s3 + $0x148] sm:$0xff]
    %v364 = vld [vmem:[%s3 + $0x150] sm:$0xff]
    %v365 = vld [vmem:[%s3 + $0x158] sm:$0xff]
    %v366 = vld [vmem:[%s3 + $0x160] sm:$0xff]
    %v367 = vld [vmem:[%s3 + $0x168] sm:$0xff]
    %v368 = vld [vmem:[%s3 + $0x170] sm:$0xff]
    %v369 = vld [vmem:[%s3 + $0x178] sm:$0xff]
    %v370 = vld [vmem:[%s3 + $0x180] sm:$0xff]
    %v371 = vld [vmem:[%s3 + $0x188] sm:$0xff]
    %372 = vmatpush.msra.mxu0 0.0
    %373 = vmatpush.msra.mxu0 0.0
    %374 = vmatpush.msra.mxu0 0.0
    %375 = vmatpush.msra.mxu0 0.0
    %376 = vmatpush.msra.mxu0 0.0
    %377 = vmatpush.msra.mxu0 0.0
    %378 = vmatpush.msra.mxu0 %v371
    %379 = vmatpush.msra.mxu0 %v370
    %380 = vmatpush.msra.mxu0 %v369
    %381 = vmatpush.msra.mxu0 %v368
    %382 = vmatpush.msra.mxu0 %v367
    %383 = vmatpush.msra.mxu0 %v366
    %384 = vmatpush.msra.mxu0 %v365
    %385 = vmatpush.msra.mxu0 %v364
    %386 = vmatpush.msra.mxu0 %v363
    %387 = vmatpush.msra.mxu0 %v362
    %388 = vmatmul.f32.gmra.mxu0 %v235
    %v389 = vpop.f32.mrf.mxu0
    %v390 = vadd.f32 0.0, %v389
    %391 = vmatmul.f32.gmra.mxu0 %v238
    %v392 = vpop.f32.mrf.mxu0
    %v393 = vadd.f32 0.0, %v392
    %394 = vdwg.mxu0
    %v395 = vld [vmem:[%s5] sm:$0xff]
    %v396 = vld [vmem:[%s4] sm:$0x1]
    %v398 = vperm.slane %v396, 0
    %v401 = vsel %vm233, %v395, 0
    %403 = vmatpush.msra.mxu0 0.0
    %404 = vmatpush.msra.mxu0 0.0
    %405 = vmatpush.msra.mxu0 0.0
    %406 = vmatpush.msra.mxu0 0.0
    %407 = vmatpush.msra.mxu0 0.0
    %408 = vmatpush.msra.mxu0 0.0
    %409 = vmatpush.msra.mxu0 %v393
    %410 = vmatpush.msra.mxu0 %v390
    %411 = vmatpush.msra.mxu0 %v360
    %412 = vmatpush.msra.mxu0 %v357
    %413 = vmatpush.msra.mxu0 %v327
    %414 = vmatpush.msra.mxu0 %v324
    %415 = vmatpush.msra.mxu0 %v294
    %416 = vmatpush.msra.mxu0 %v291
    %417 = vmatpush.msra.mxu0 %v261
    %418 = vmatpush.msra.mxu0 %v258
    %419 = vmatmul.f32.gmra.mxu0 %v401
    %v420 = vpop.f32.mrf.mxu0
    %v421 = vadd.f32 %v398, %v420
    %422 = vdwg.mxu0
    %v423 = vmax.f32 %v421, 0.0
    %425 = vrot.lane.b32.xlu0 %v423, 96
    %v426 = vpop.permute.xlu0 %425
    %v428 = vmax.f32 %v423, %v426
    %430 = vrot.lane.b32.xlu0 %v428, 64
    %v431 = vpop.permute.xlu0 %430
    %v433 = vmax.f32 %v428, %v431
    %v434 = vld [vmem:[%s6] sm:$0xff]
    %v435 = vld [vmem:[%s6 + $0x8] sm:$0xff]
    %v436 = vld [vmem:[%s6 + $0x10] sm:$0xff]
    %v437 = vld [vmem:[%s6 + $0x18] sm:$0xff]
    %v438 = vld [vmem:[%s7] sm:$0x1]
    %v440 = vperm.slane %v438, 0
    %v443 = vsel %vm102, %v433, 0
    %445 = vmatpush.msra.mxu0 0.0
    %446 = vmatpush.msra.mxu0 0.0
    %447 = vmatpush.msra.mxu0 0.0
    %448 = vmatpush.msra.mxu0 0.0
    %449 = vmatpush.msra.mxu0 0.0
    %450 = vmatpush.msra.mxu0 0.0
    %451 = vmatpush.msra.mxu0 0.0
    %452 = vmatpush.msra.mxu0 0.0
    %453 = vmatpush.msra.mxu0 0.0
    %454 = vmatpush.msra.mxu0 0.0
    %455 = vmatpush.msra.mxu0 0.0
    %456 = vmatpush.msra.mxu0 0.0
    %457 = vmatpush.msra.mxu0 %v437
    %458 = vmatpush.msra.mxu0 %v436
    %459 = vmatpush.msra.mxu0 %v435
    %460 = vmatpush.msra.mxu0 %v434
    %461 = vmatmul.f32.gmra.mxu0 %v443
    %v462 = vpop.f32.mrf.mxu0
    %v463 = vadd.f32 %v440, %v462
    %464 = vdwg.mxu0
    %vm465 = vcmask 58368
    %466 = vst.msk [vmem:[#allocation2] sm:$0x3] %vm465, %v463
    %v467 = vlaneseq
    %v468 = vshrl.u32 %v467, 7
    %vm469 = vcmp.lt.s32.totalorder %v468, 2
    %v470 = vsel %vm469, 1, 0
    %v471 = vcvt.s32.f32 %v470
    %v472 = vld [vmem:[%s8] sm:$0xff]
    %v473 = vld [vmem:[%s9] sm:$0x1]
    %v475 = vperm.slane %v473, 0
    %vm477 = vcmask 64512
    %v479 = vsel %vm477, %v463, 0
    %481 = vmatpush.msra.mxu0 0.0
    %482 = vmatpush.msra.mxu0 0.0
    %483 = vmatpush.msra.mxu0 0.0
    %484 = vmatpush.msra.mxu0 0.0
    %485 = vmatpush.msra.mxu0 0.0
    %486 = vmatpush.msra.mxu0 0.0
    %487 = vmatpush.msra.mxu0 0.0
    %488 = vmatpush.msra.mxu0 0.0
    %489 = vmatpush.msra.mxu0 0.0
    %490 = vmatpush.msra.mxu0 0.0
    %491 = vmatpush.msra.mxu0 0.0
    %492 = vmatpush.msra.mxu0 0.0
    %493 = vmatpush.msra.mxu0 0.0
    %494 = vmatpush.msra.mxu0 0.0
    %495 = vmatpush.msra.mxu0 0.0
    %496 = vmatpush.msra.mxu0 %v472
    %497 = vmatmul.f32.gmra.mxu0 %v479
    %v498 = vpop.f32.mrf.mxu0
    %v499 = vadd.f32 %v475, %v498
    %500 = vdwg.mxu0
    %v501 = vmax.f32 %v499, 0.0
    %v502 = vmul.f32 %v501, %v471
    %v503 = vld [vmem:[%s10] sm:$0xff]
    %v504 = vld [vmem:[%s10 + $0x8] sm:$0xff]
    %v505 = vld [vmem:[%s10 + $0x10] sm:$0xff]
    %v506 = vld [vmem:[%s10 + $0x18] sm:$0xff]
    %v508 = vsel %vm102, %v502, 0
    %510 = vmatpush.msra.mxu0 0.0
    %511 = vmatpush.msra.mxu0 0.0
    %512 = vmatpush.msra.mxu0 0.0
    %513 = vmatpush.msra.mxu0 0.0
    %514 = vmatpush.msra.mxu0 0.0
    %515 = vmatpush.msra.mxu0 0.0
    %516 = vmatpush.msra.mxu0 0.0
    %517 = vmatpush.msra.mxu0 0.0
    %518 = vmatpush.msra.mxu0 0.0
    %519 = vmatpush.msra.mxu0 0.0
    %520 = vmatpush.msra.mxu0 0.0
    %521 = vmatpush.msra.mxu0 0.0
    %522 = vmatpush.msra.mxu0 %v506
    %523 = vmatpush.msra.mxu0 %v505
    %524 = vmatpush.msra.mxu0 %v504
    %525 = vmatpush.msra.mxu0 %v503
    %526 = vmatmul.f32.gmra.mxu0 %v508
    %v527 = vpop.f32.mrf.mxu0
    %v528 = vadd.f32 0.0, %v527
    %529 = vdwg.mxu0
    %v530 = vld [vmem:[%s10 + $0x20] sm:$0xff]
    %v531 = vld [vmem:[%s10 + $0x28] sm:$0xff]
    %v532 = vld [vmem:[%s10 + $0x30] sm:$0xff]
    %v533 = vld [vmem:[%s10 + $0x38] sm:$0xff]
    %534 = vmatpush.msra.mxu0 0.0
    %535 = vmatpush.msra.mxu0 0.0
    %536 = vmatpush.msra.mxu0 0.0
    %537 = vmatpush.msra.mxu0 0.0
    %538 = vmatpush.msra.mxu0 0.0
    %539 = vmatpush.msra.mxu0 0.0
    %540 = vmatpush.msra.mxu0 0.0
    %541 = vmatpush.msra.mxu0 0.0
    %542 = vmatpush.msra.mxu0 0.0
    %543 = vmatpush.msra.mxu0 0.0
    %544 = vmatpush.msra.mxu0 0.0
    %545 = vmatpush.msra.mxu0 0.0
    %546 = vmatpush.msra.mxu0 %v533
    %547 = vmatpush.msra.mxu0 %v532
    %548 = vmatpush.msra.mxu0 %v531
    %549 = vmatpush.msra.mxu0 %v530
    %550 = vmatmul.f32.gmra.mxu0 %v508
    %v551 = vpop.f32.mrf.mxu0
    %v552 = vadd.f32 0.0, %v551
    %553 = vdwg.mxu0
    %v554 = vld [vmem:[%s10 + $0x40] sm:$0xff]
    %v555 = vld [vmem:[%s10 + $0x48] sm:$0xff]
    %v556 = vld [vmem:[%s10 + $0x50] sm:$0xff]
    %v557 = vld [vmem:[%s10 + $0x58] sm:$0xff]
    %558 = vmatpush.msra.mxu0 0.0
    %559 = vmatpush.msra.mxu0 0.0
    %560 = vmatpush.msra.mxu0 0.0
    %561 = vmatpush.msra.mxu0 0.0
    %562 = vmatpush.msra.mxu0 0.0
    %563 = vmatpush.msra.mxu0 0.0
    %564 = vmatpush.msra.mxu0 0.0
    %565 = vmatpush.msra.mxu0 0.0
    %566 = vmatpush.msra.mxu0 0.0
    %567 = vmatpush.msra.mxu0 0.0
    %568 = vmatpush.msra.mxu0 0.0
    %569 = vmatpush.msra.mxu0 0.0
    %570 = vmatpush.msra.mxu0 %v557
    %571 = vmatpush.msra.mxu0 %v556
    %572 = vmatpush.msra.mxu0 %v555
    %573 = vmatpush.msra.mxu0 %v554
    %574 = vmatmul.f32.gmra.mxu0 %v508
    %v575 = vpop.f32.mrf.mxu0
    %v576 = vadd.f32 0.0, %v575
    %577 = vdwg.mxu0
    %v578 = vld [vmem:[%s10 + $0x60] sm:$0xff]
    %v579 = vld [vmem:[%s10 + $0x68] sm:$0xff]
    %v580 = vld [vmem:[%s10 + $0x70] sm:$0xff]
    %v581 = vld [vmem:[%s10 + $0x78] sm:$0xff]
    %582 = vmatpush.msra.mxu0 0.0
    %583 = vmatpush.msra.mxu0 0.0
    %584 = vmatpush.msra.mxu0 0.0
    %585 = vmatpush.msra.mxu0 0.0
    %586 = vmatpush.msra.mxu0 0.0
    %587 = vmatpush.msra.mxu0 0.0
    %588 = vmatpush.msra.mxu0 0.0
    %589 = vmatpush.msra.mxu0 0.0
    %590 = vmatpush.msra.mxu0 0.0
    %591 = vmatpush.msra.mxu0 0.0
    %592 = vmatpush.msra.mxu0 0.0
    %593 = vmatpush.msra.mxu0 0.0
    %594 = vmatpush.msra.mxu0 %v581
    %595 = vmatpush.msra.mxu0 %v580
    %596 = vmatpush.msra.mxu0 %v579
    %597 = vmatpush.msra.mxu0 %v578
    %598 = vmatmul.f32.gmra.mxu0 %v508
    %v599 = vpop.f32.mrf.mxu0
    %v600 = vadd.f32 0.0, %v599
    %601 = vdwg.mxu0
    %v602 = vld [vmem:[%s10 + $0x80] sm:$0xff]
    %v603 = vld [vmem:[%s10 + $0x88] sm:$0xff]
    %v604 = vld [vmem:[%s10 + $0x90] sm:$0xff]
    %v605 = vld [vmem:[%s10 + $0x98] sm:$0xff]
    %606 = vmatpush.msra.mxu0 0.0
    %607 = vmatpush.msra.mxu0 0.0
    %608 = vmatpush.msra.mxu0 0.0
    %609 = vmatpush.msra.mxu0 0.0
    %610 = vmatpush.msra.mxu0 0.0
    %611 = vmatpush.msra.mxu0 0.0
    %612 = vmatpush.msra.mxu0 0.0
    %613 = vmatpush.msra.mxu0 0.0
    %614 = vmatpush.msra.mxu0 0.0
    %615 = vmatpush.msra.mxu0 0.0
    %616 = vmatpush.msra.mxu0 0.0
    %617 = vmatpush.msra.mxu0 0.0
    %618 = vmatpush.msra.mxu0 %v605
    %619 = vmatpush.msra.mxu0 %v604
    %620 = vmatpush.msra.mxu0 %v603
    %621 = vmatpush.msra.mxu0 %v602
    %622 = vmatmul.f32.gmra.mxu0 %v508
    %v623 = vpop.f32.mrf.mxu0
    %v624 = vadd.f32 0.0, %v623
    %625 = vdwg.mxu0
    %v626 = vld [vmem:[%s11] sm:$0x1]
    %v628 = vperm.slane %v626, 0
    %v630 = vadd.f32 %v528, %v628
    %v631 = vadd.f32 %v552, %v628
    %v632 = vadd.f32 %v576, %v628
    %v633 = vadd.f32 %v600, %v628
    %v634 = vadd.f32 %v624, %v628
    %v635 = vmax.f32 %v630, 0.0
    %v636 = vmax.f32 %v631, 0.0
    %v637 = vmax.f32 %v632, 0.0
    %v638 = vmax.f32 %v633, 0.0
    %v639 = vmax.f32 %v634, 0.0
    %v640 = vld [vmem:[%s12] sm:$0xff]
    %v641 = vld [vmem:[%s12 + $0x8] sm:$0xff]
    %v642 = vld [vmem:[%s12 + $0x10] sm:$0xff]
    %v643 = vld [vmem:[%s12 + $0x18] sm:$0xff]
    %v644 = vld [vmem:[%s12 + $0x20] sm:$0xff]
    %v645 = vld [vmem:[%s12 + $0x28] sm:$0xff]
    %v646 = vld [vmem:[%s12 + $0x30] sm:$0xff]
    %v647 = vld [vmem:[%s12 + $0x38] sm:$0xff]
    %v648 = vld [vmem:[%s12 + $0x40] sm:$0xff]
    %v649 = vld [vmem:[%s12 + $0x48] sm:$0xff]
    %v651 = vsel %vm233, %v635, 0
    %v654 = vsel %vm233, %v636, 0
    %v657 = vsel %vm233, %v637, 0
    %v660 = vsel %vm233, %v638, 0
    %v663 = vsel %vm233, %v639, 0
    %665 = vmatpush.msra.mxu0 0.0
    %666 = vmatpush.msra.mxu0 0.0
    %667 = vmatpush.msra.mxu0 0.0
    %668 = vmatpush.msra.mxu0 0.0
    %669 = vmatpush.msra.mxu0 0.0
    %670 = vmatpush.msra.mxu0 0.0
    %671 = vmatpush.msra.mxu0 %v649
    %672 = vmatpush.msra.mxu0 %v648
    %673 = vmatpush.msra.mxu0 %v647
    %674 = vmatpush.msra.mxu0 %v646
    %675 = vmatpush.msra.mxu0 %v645
    %676 = vmatpush.msra.mxu0 %v644
    %677 = vmatpush.msra.mxu0 %v643
    %678 = vmatpush.msra.mxu0 %v642
    %679 = vmatpush.msra.mxu0 %v641
    %680 = vmatpush.msra.mxu0 %v640
    %681 = vmatmul.f32.gmra.mxu0 %v651
    %v682 = vpop.f32.mrf.mxu0
    %v683 = vadd.f32 0.0, %v682
    %684 = vmatmul.f32.gmra.mxu0 %v654
    %v685 = vpop.f32.mrf.mxu0
    %v686 = vadd.f32 0.0, %v685
    %687 = vmatmul.f32.gmra.mxu0 %v657
    %v688 = vpop.f32.mrf.mxu0
    %v689 = vadd.f32 0.0, %v688
    %690 = vmatmul.f32.gmra.mxu0 %v660
    %v691 = vpop.f32.mrf.mxu0
    %v692 = vadd.f32 0.0, %v691
    %693 = vmatmul.f32.gmra.mxu0 %v663
    %v694 = vpop.f32.mrf.mxu0
    %v695 = vadd.f32 0.0, %v694
    %696 = vdwg.mxu0
    %v697 = vld [vmem:[%s12 + $0x50] sm:$0xff]
    %v698 = vld [vmem:[%s12 + $0x58] sm:$0xff]
    %v699 = vld [vmem:[%s12 + $0x60] sm:$0xff]
    %v700 = vld [vmem:[%s12 + $0x68] sm:$0xff]
    %v701 = vld [vmem:[%s12 + $0x70] sm:$0xff]
    %v702 = vld [vmem:[%s12 + $0x78] sm:$0xff]
    %v703 = vld [vmem:[%s12 + $0x80] sm:$0xff]
    %v704 = vld [vmem:[%s12 + $0x88] sm:$0xff]
    %v705 = vld [vmem:[%s12 + $0x90] sm:$0xff]
    %v706 = vld [vmem:[%s12 + $0x98] sm:$0xff]
    %707 = vmatpush.msra.mxu0 0.0
    %708 = vmatpush.msra.mxu0 0.0
    %709 = vmatpush.msra.mxu0 0.0
    %710 = vmatpush.msra.mxu0 0.0
    %711 = vmatpush.msra.mxu0 0.0
    %712 = vmatpush.msra.mxu0 0.0
    %713 = vmatpush.msra.mxu0 %v706
    %714 = vmatpush.msra.mxu0 %v705
    %715 = vmatpush.msra.mxu0 %v704
    %716 = vmatpush.msra.mxu0 %v703
    %717 = vmatpush.msra.mxu0 %v702
    %718 = vmatpush.msra.mxu0 %v701
    %719 = vmatpush.msra.mxu0 %v700
    %720 = vmatpush.msra.mxu0 %v699
    %721 = vmatpush.msra.mxu0 %v698
    %722 = vmatpush.msra.mxu0 %v697
    %723 = vmatmul.f32.gmra.mxu0 %v651
    %v724 = vpop.f32.mrf.mxu0
    %v725 = vadd.f32 0.0, %v724
    %726 = vmatmul.f32.gmra.mxu0 %v654
    %v727 = vpop.f32.mrf.mxu0
    %v728 = vadd.f32 0.0, %v727
    %729 = vmatmul.f32.gmra.mxu0 %v657
    %v730 = vpop.f32.mrf.mxu0
    %v731 = vadd.f32 0.0, %v730
    %732 = vmatmul.f32.gmra.mxu0 %v660
    %v733 = vpop.f32.mrf.mxu0
    %v734 = vadd.f32 0.0, %v733
    %735 = vmatmul.f32.gmra.mxu0 %v663
    %v736 = vpop.f32.mrf.mxu0
    %v737 = vadd.f32 0.0, %v736
    %738 = vdwg.mxu0
    %v739 = vld [vmem:[%s12 + $0xa0] sm:$0xff]
    %v740 = vld [vmem:[%s12 + $0xa8] sm:$0xff]
    %v741 = vld [vmem:[%s12 + $0xb0] sm:$0xff]
    %v742 = vld [vmem:[%s12 + $0xb8] sm:$0xff]
    %v743 = vld [vmem:[%s12 + $0xc0] sm:$0xff]
    %v744 = vld [vmem:[%s12 + $0xc8] sm:$0xff]
    %v745 = vld [vmem:[%s12 + $0xd0] sm:$0xff]
    %v746 = vld [vmem:[%s12 + $0xd8] sm:$0xff]
    %v747 = vld [vmem:[%s12 + $0xe0] sm:$0xff]
    %v748 = vld [vmem:[%s12 + $0xe8] sm:$0xff]
    %749 = vmatpush.msra.mxu0 0.0
    %750 = vmatpush.msra.mxu0 0.0
    %751 = vmatpush.msra.mxu0 0.0
    %752 = vmatpush.msra.mxu0 0.0
    %753 = vmatpush.msra.mxu0 0.0
    %754 = vmatpush.msra.mxu0 0.0
    %755 = vmatpush.msra.mxu0 %v748
    %756 = vmatpush.msra.mxu0 %v747
    %757 = vmatpush.msra.mxu0 %v746
    %758 = vmatpush.msra.mxu0 %v745
    %759 = vmatpush.msra.mxu0 %v744
    %760 = vmatpush.msra.mxu0 %v743
    %761 = vmatpush.msra.mxu0 %v742
    %762 = vmatpush.msra.mxu0 %v741
    %763 = vmatpush.msra.mxu0 %v740
    %764 = vmatpush.msra.mxu0 %v739
    %765 = vmatmul.f32.gmra.mxu0 %v651
    %v766 = vpop.f32.mrf.mxu0
    %v767 = vadd.f32 0.0, %v766
    %768 = vmatmul.f32.gmra.mxu0 %v654
    %v769 = vpop.f32.mrf.mxu0
    %v770 = vadd.f32 0.0, %v769
    %771 = vmatmul.f32.gmra.mxu0 %v657
    %v772 = vpop.f32.mrf.mxu0
    %v773 = vadd.f32 0.0, %v772
    %774 = vmatmul.f32.gmra.mxu0 %v660
    %v775 = vpop.f32.mrf.mxu0
    %v776 = vadd.f32 0.0, %v775
    %777 = vmatmul.f32.gmra.mxu0 %v663
    %v778 = vpop.f32.mrf.mxu0
    %v779 = vadd.f32 0.0, %v778
    %780 = vdwg.mxu0
    %v781 = vld [vmem:[%s12 + $0xf0] sm:$0xff]
    %v782 = vld [vmem:[%s12 + $0xf8] sm:$0xff]
    %v783 = vld [vmem:[%s12 + $0x100] sm:$0xff]
    %v784 = vld [vmem:[%s12 + $0x108] sm:$0xff]
    %v785 = vld [vmem:[%s12 + $0x110] sm:$0xff]
    %v786 = vld [vmem:[%s12 + $0x118] sm:$0xff]
    %v787 = vld [vmem:[%s12 + $0x120] sm:$0xff]
    %v788 = vld [vmem:[%s12 + $0x128] sm:$0xff]
    %v789 = vld [vmem:[%s12 + $0x130] sm:$0xff]
    %v790 = vld [vmem:[%s12 + $0x138] sm:$0xff]
    %791 = vmatpush.msra.mxu0 0.0
    %792 = vmatpush.msra.mxu0 0.0
    %793 = vmatpush.msra.mxu0 0.0
    %794 = vmatpush.msra.mxu0 0.0
    %795 = vmatpush.msra.mxu0 0.0
    %796 = vmatpush.msra.mxu0 0.0
    %797 = vmatpush.msra.mxu0 %v790
    %798 = vmatpush.msra.mxu0 %v789
    %799 = vmatpush.msra.mxu0 %v788
    %800 = vmatpush.msra.mxu0 %v787
    %801 = vmatpush.msra.mxu0 %v786
    %802 = vmatpush.msra.mxu0 %v785
    %803 = vmatpush.msra.mxu0 %v784
    %804 = vmatpush.msra.mxu0 %v783
    %805 = vmatpush.msra.mxu0 %v782
    %806 = vmatpush.msra.mxu0 %v781
    %807 = vmatmul.f32.gmra.mxu0 %v651
    %v808 = vpop.f32.mrf.mxu0
    %v809 = vadd.f32 0.0, %v808
    %810 = vmatmul.f32.gmra.mxu0 %v654
    %v811 = vpop.f32.mrf.mxu0
    %v812 = vadd.f32 0.0, %v811
    %813 = vmatmul.f32.gmra.mxu0 %v657
    %v814 = vpop.f32.mrf.mxu0
    %v815 = vadd.f32 0.0, %v814
    %816 = vmatmul.f32.gmra.mxu0 %v660
    %v817 = vpop.f32.mrf.mxu0
    %v818 = vadd.f32 0.0, %v817
    %819 = vmatmul.f32.gmra.mxu0 %v663
    %v820 = vpop.f32.mrf.mxu0
    %v821 = vadd.f32 0.0, %v820
    %822 = vdwg.mxu0
    %v823 = vld [vmem:[%s12 + $0x140] sm:$0xff]
    %v824 = vld [vmem:[%s12 + $0x148] sm:$0xff]
    %v825 = vld [vmem:[%s12 + $0x150] sm:$0xff]
    %v826 = vld [vmem:[%s12 + $0x158] sm:$0xff]
    %v827 = vld [vmem:[%s12 + $0x160] sm:$0xff]
    %v828 = vld [vmem:[%s12 + $0x168] sm:$0xff]
    %v829 = vld [vmem:[%s12 + $0x170] sm:$0xff]
    %v830 = vld [vmem:[%s12 + $0x178] sm:$0xff]
    %v831 = vld [vmem:[%s12 + $0x180] sm:$0xff]
    %v832 = vld [vmem:[%s12 + $0x188] sm:$0xff]
    %833 = vmatpush.msra.mxu0 0.0
    %834 = vmatpush.msra.mxu0 0.0
    %835 = vmatpush.msra.mxu0 0.0
    %836 = vmatpush.msra.mxu0 0.0
    %837 = vmatpush.msra.mxu0 0.0
    %838 = vmatpush.msra.mxu0 0.0
    %839 = vmatpush.msra.mxu0 %v832
    %840 = vmatpush.msra.mxu0 %v831
    %841 = vmatpush.msra.mxu0 %v830
    %842 = vmatpush.msra.mxu0 %v829
    %843 = vmatpush.msra.mxu0 %v828
    %844 = vmatpush.msra.mxu0 %v827
    %845 = vmatpush.msra.mxu0 %v826
    %846 = vmatpush.msra.mxu0 %v825
    %847 = vmatpush.msra.mxu0 %v824
    %848 = vmatpush.msra.mxu0 %v823
    %849 = vmatmul.f32.gmra.mxu0 %v651
    %v850 = vpop.f32.mrf.mxu0
    %v851 = vadd.f32 0.0, %v850
    %852 = vmatmul.f32.gmra.mxu0 %v654
    %v853 = vpop.f32.mrf.mxu0
    %v854 = vadd.f32 0.0, %v853
    %855 = vmatmul.f32.gmra.mxu0 %v657
    %v856 = vpop.f32.mrf.mxu0
    %v857 = vadd.f32 0.0, %v856
    %858 = vmatmul.f32.gmra.mxu0 %v660
    %v859 = vpop.f32.mrf.mxu0
    %v860 = vadd.f32 0.0, %v859
    %861 = vmatmul.f32.gmra.mxu0 %v663
    %v862 = vpop.f32.mrf.mxu0
    %v863 = vadd.f32 0.0, %v862
    %864 = vdwg.mxu0
    %v865 = vld [vmem:[%s14] sm:$0xff]
    %v866 = vld [vmem:[%s14 + $0x8] sm:$0xff]
    %v867 = vld [vmem:[%s14 + $0x10] sm:$0xff]
    %v868 = vld [vmem:[%s14 + $0x18] sm:$0xff]
    %v869 = vld [vmem:[%s14 + $0x20] sm:$0xff]
    %v870 = vld [vmem:[%s14 + $0x28] sm:$0xff]
    %v871 = vld [vmem:[%s14 + $0x30] sm:$0xff]
    %v872 = vld [vmem:[%s14 + $0x38] sm:$0xff]
    %v873 = vld [vmem:[%s13] sm:$0x1]
    %v875 = vperm.slane %v873, 0
    %vm877 = vcmask 588800
    %v879 = vsel %vm877, %v866, 0
    %v882 = vsel %vm877, %v868, 0
    %v885 = vsel %vm877, %v870, 0
    %v888 = vsel %vm877, %v872, 0
    %890 = vmatpush.msra.mxu0 %v809
    %891 = vmatpush.msra.mxu0 %v779
    %892 = vmatpush.msra.mxu0 %v776
    %893 = vmatpush.msra.mxu0 %v773
    %894 = vmatpush.msra.mxu0 %v770
    %895 = vmatpush.msra.mxu0 %v767
    %896 = vmatpush.msra.mxu0 %v737
    %897 = vmatpush.msra.mxu0 %v734
    %898 = vmatpush.msra.mxu0 %v731
    %899 = vmatpush.msra.mxu0 %v728
    %900 = vmatpush.msra.mxu0 %v725
    %901 = vmatpush.msra.mxu0 %v695
    %902 = vmatpush.msra.mxu0 %v692
    %903 = vmatpush.msra.mxu0 %v689
    %904 = vmatpush.msra.mxu0 %v686
    %905 = vmatpush.msra.mxu0 %v683
    %906 = vmatmul.f32.gmra.mxu0 %v865
    %v907 = vpop.f32.mrf.mxu0
    %v908 = vadd.f32 %v875, %v907
    %909 = vmatmul.f32.gmra.mxu0 %v867
    %v910 = vpop.f32.mrf.mxu0
    %v911 = vadd.f32 %v875, %v910
    %912 = vmatmul.f32.gmra.mxu0 %v869
    %v913 = vpop.f32.mrf.mxu0
    %v914 = vadd.f32 %v875, %v913
    %915 = vmatmul.f32.gmra.mxu0 %v871
    %v916 = vpop.f32.mrf.mxu0
    %v917 = vadd.f32 %v875, %v916
    %918 = vdwg.mxu0
    %919 = vmatpush.msra.mxu0 0.0
    %920 = vmatpush.msra.mxu0 0.0
    %921 = vmatpush.msra.mxu0 0.0
    %922 = vmatpush.msra.mxu0 0.0
    %923 = vmatpush.msra.mxu0 0.0
    %924 = vmatpush.msra.mxu0 0.0
    %925 = vmatpush.msra.mxu0 0.0
    %926 = vmatpush.msra.mxu0 %v863
    %927 = vmatpush.msra.mxu0 %v860
    %928 = vmatpush.msra.mxu0 %v857
    %929 = vmatpush.msra.mxu0 %v854
    %930 = vmatpush.msra.mxu0 %v851
    %931 = vmatpush.msra.mxu0 %v821
    %932 = vmatpush.msra.mxu0 %v818
    %933 = vmatpush.msra.mxu0 %v815
    %934 = vmatpush.msra.mxu0 %v812
    %935 = vmatmul.f32.gmra.mxu0 %v879
    %v936 = vpop.f32.mrf.mxu0
    %v937 = vadd.f32 %v908, %v936
    %938 = vmatmul.f32.gmra.mxu0 %v882
    %v939 = vpop.f32.mrf.mxu0
    %v940 = vadd.f32 %v911, %v939
    %941 = vmatmul.f32.gmra.mxu0 %v885
    %v942 = vpop.f32.mrf.mxu0
    %v943 = vadd.f32 %v914, %v942
    %944 = vmatmul.f32.gmra.mxu0 %v888
    %v945 = vpop.f32.mrf.mxu0
    %v946 = vadd.f32 %v917, %v945
    %947 = vdwg.mxu0
    %v948 = vadd.s32 %v468, 8
    %v949 = vadd.s32 %v468, 16
    %v950 = vadd.s32 %v468, 24
    %vm951 = vcmp.lt.s32.totalorder %v468, 0
    %v952 = vsub.s32 0, %v468
    %v953 = vsel %vm951, %v952, %v468
    %v954 = vshrl.u32 %v953, 4
    %v955 = vand.u32 %v953, 15
    %v956 = vsub.s32 0, %v955
    %v957 = vsel %vm951, %v956, %v955
    %vm958 = vcmp.lt.s32.totalorder %v948, 0
    %v959 = vsub.s32 0, %v948
    %v960 = vsel %vm958, %v959, %v948
    %v961 = vshrl.u32 %v960, 4
    %v962 = vand.u32 %v960, 15
    %v963 = vsub.s32 0, %v962
    %v964 = vsel %vm958, %v963, %v962
    %vm965 = vcmp.lt.s32.totalorder %v949, 0
    %v966 = vsub.s32 0, %v949
    %v967 = vsel %vm965, %v966, %v949
    %v968 = vshrl.u32 %v967, 4
    %v969 = vand.u32 %v967, 15
    %v970 = vsub.s32 0, %v969
    %v971 = vsel %vm965, %v970, %v969
    %vm972 = vcmp.lt.s32.totalorder %v950, 0
    %v973 = vsub.s32 0, %v950
    %v974 = vsel %vm972, %v973, %v950
    %v975 = vshrl.u32 %v974, 4
    %v976 = vand.u32 %v974, 15
    %v977 = vsub.s32 0, %v976
    %v978 = vsel %vm972, %v977, %v976
    %vm979 = vcmp.ne.s32.totalorder %v957, 0
    %vm980 = vcmp.ne.s32.totalorder %v964, 0
    %vm981 = vcmp.ne.s32.totalorder %v971, 0
    %vm982 = vcmp.ne.s32.totalorder %v978, 0
    %vm983 = vcmp.lt.s32.totalorder %v957, 0
    %vm984 = vcmp.lt.s32.totalorder %v964, 0
    %vm985 = vcmp.lt.s32.totalorder %v971, 0
    %vm986 = vcmp.lt.s32.totalorder %v978, 0
    %vm987 = vmand %vm983, %vm979
    %vm988 = vmand %vm984, %vm980
    %vm989 = vmand %vm985, %vm981
    %vm990 = vmand %vm986, %vm982
    %v991 = vadd.s32 %v957, 16
    %v992 = vadd.s32 %v964, 16
    %v993 = vadd.s32 %v971, 16
    %v994 = vadd.s32 %v978, 16
    %v995 = vsel %vm987, %v991, %v957
    %v996 = vsel %vm988, %v992, %v964
    %v997 = vsel %vm989, %v993, %v971
    %v998 = vsel %vm990, %v994, %v978
    %vm999 = vcmp.lt.s32.totalorder %v995, 15
    %vm1000 = vcmp.lt.s32.totalorder %v996, 15
    %vm1001 = vcmp.lt.s32.totalorder %v997, 15
    %vm1002 = vcmp.lt.s32.totalorder %v998, 15
    %v1003 = vmax.f32 %v937, 0.0
    %v1004 = vmax.f32 %v940, 0.0
    %v1005 = vmax.f32 %v943, 0.0
    %v1006 = vmax.f32 %v946, 0.0
    %v1007 = vsel %vm999, 1, 0
    %v1008 = vsel %vm1000, 1, 0
    %v1009 = vsel %vm1001, 1, 0
    %v1010 = vsel %vm1002, 1, 0
    %v1011 = vcvt.s32.f32 %v1007
    %v1012 = vcvt.s32.f32 %v1008
    %v1013 = vcvt.s32.f32 %v1009
    %v1014 = vcvt.s32.f32 %v1010
    %v1015 = vmul.f32 %v1003, %v1011
    %v1016 = vmul.f32 %v1004, %v1012
    %v1017 = vmul.f32 %v1005, %v1013
    %v1018 = vmul.f32 %v1006, %v1014
    %v1019 = vld [vmem:[%s15] sm:$0xff]
    %v1020 = vld [vmem:[%s15 + $0x8] sm:$0xff]
    %v1021 = vld [vmem:[%s15 + $0x10] sm:$0xff]
    %v1022 = vld [vmem:[%s15 + $0x18] sm:$0xff]
    %v1023 = vld [vmem:[%s15 + $0x20] sm:$0xff]
    %v1024 = vld [vmem:[%s15 + $0x28] sm:$0xff]
    %v1025 = vld [vmem:[%s15 + $0x30] sm:$0xff]
    %v1026 = vld [vmem:[%s15 + $0x38] sm:$0xff]
    %v1027 = vld [vmem:[%s15 + $0x40] sm:$0xff]
    %v1028 = vld [vmem:[%s15 + $0x48] sm:$0xff]
    %v1029 = vld [vmem:[%s15 + $0x50] sm:$0xff]
    %v1030 = vld [vmem:[%s15 + $0x58] sm:$0xff]
    %v1031 = vld [vmem:[%s15 + $0x60] sm:$0xff]
    %v1032 = vld [vmem:[%s15 + $0x68] sm:$0xff]
    %v1033 = vld [vmem:[%s15 + $0x70] sm:$0xff]
    %v1034 = vld [vmem:[%s15 + $0x78] sm:$0xff]
    %v1035 = vld [vmem:[%s15 + $0x80] sm:$0xff]
    %v1036 = vld [vmem:[%s15 + $0x88] sm:$0xff]
    %v1037 = vld [vmem:[%s15 + $0x90] sm:$0xff]
    %v1038 = vld [vmem:[%s15 + $0x98] sm:$0xff]
    %v1039 = vld [vmem:[%s15 + $0xa0] sm:$0xff]
    %v1040 = vld [vmem:[%s15 + $0xa8] sm:$0xff]
    %v1041 = vld [vmem:[%s15 + $0xb0] sm:$0xff]
    %v1042 = vld [vmem:[%s15 + $0xb8] sm:$0xff]
    %v1043 = vld [vmem:[%s15 + $0xc0] sm:$0xff]
    %v1044 = vld [vmem:[%s15 + $0xc8] sm:$0xff]
    %v1045 = vld [vmem:[%s15 + $0xd0] sm:$0xff]
    %v1046 = vld [vmem:[%s15 + $0xd8] sm:$0xff]
    %v1047 = vld [vmem:[%s15 + $0xe0] sm:$0xff]
    %v1048 = vld [vmem:[%s15 + $0xe8] sm:$0xff]
    %vm1049 = vcmask 982016
    %v1051 = vsel %vm1049, %v1015, 0
    %v1054 = vsel %vm1049, %v1016, 0
    %v1057 = vsel %vm1049, %v1017, 0
    %v1060 = vsel %vm1049, %v1018, 0
    %1062 = vmatpush.msra.mxu0 0.0
    %1063 = vmatpush.msra.mxu0 %v1047
    %1064 = vmatpush.msra.mxu0 %v1045
    %1065 = vmatpush.msra.mxu0 %v1043
    %1066 = vmatpush.msra.mxu0 %v1041
    %1067 = vmatpush.msra.mxu0 %v1039
    %1068 = vmatpush.msra.mxu0 %v1037
    %1069 = vmatpush.msra.mxu0 %v1035
    %1070 = vmatpush.msra.mxu0 %v1033
    %1071 = vmatpush.msra.mxu0 %v1031
    %1072 = vmatpush.msra.mxu0 %v1029
    %1073 = vmatpush.msra.mxu0 %v1027
    %1074 = vmatpush.msra.mxu0 %v1025
    %1075 = vmatpush.msra.mxu0 %v1023
    %1076 = vmatpush.msra.mxu0 %v1021
    %1077 = vmatpush.msra.mxu0 %v1019
    %1078 = vmatmul.f32.gmra.mxu0 %v1051
    %v1079 = vpop.f32.mrf.mxu0
    %v1080 = vadd.f32 0.0, %v1079
    %1081 = vmatmul.f32.gmra.mxu0 %v1054
    %v1082 = vpop.f32.mrf.mxu0
    %v1083 = vadd.f32 0.0, %v1082
    %1084 = vmatmul.f32.gmra.mxu0 %v1057
    %v1085 = vpop.f32.mrf.mxu0
    %v1086 = vadd.f32 0.0, %v1085
    %1087 = vmatmul.f32.gmra.mxu0 %v1060
    %v1088 = vpop.f32.mrf.mxu0
    %v1089 = vadd.f32 0.0, %v1088
    %1090 = vdwg.mxu0
    %1091 = vmatpush.msra.mxu0 0.0
    %1092 = vmatpush.msra.mxu0 %v1048
    %1093 = vmatpush.msra.mxu0 %v1046
    %1094 = vmatpush.msra.mxu0 %v1044
    %1095 = vmatpush.msra.mxu0 %v1042
    %1096 = vmatpush.msra.mxu0 %v1040
    %1097 = vmatpush.msra.mxu0 %v1038
    %1098 = vmatpush.msra.mxu0 %v1036
    %1099 = vmatpush.msra.mxu0 %v1034
    %1100 = vmatpush.msra.mxu0 %v1032
    %1101 = vmatpush.msra.mxu0 %v1030
    %1102 = vmatpush.msra.mxu0 %v1028
    %1103 = vmatpush.msra.mxu0 %v1026
    %1104 = vmatpush.msra.mxu0 %v1024
    %1105 = vmatpush.msra.mxu0 %v1022
    %1106 = vmatpush.msra.mxu0 %v1020
    %1107 = vmatmul.f32.gmra.mxu0 %v1051
    %v1108 = vpop.f32.mrf.mxu0
    %v1109 = vadd.f32 0.0, %v1108
    %1110 = vmatmul.f32.gmra.mxu0 %v1054
    %v1111 = vpop.f32.mrf.mxu0
    %v1112 = vadd.f32 0.0, %v1111
    %1113 = vmatmul.f32.gmra.mxu0 %v1057
    %v1114 = vpop.f32.mrf.mxu0
    %v1115 = vadd.f32 0.0, %v1114
    %1116 = vmatmul.f32.gmra.mxu0 %v1060
    %v1117 = vpop.f32.mrf.mxu0
    %v1118 = vadd.f32 0.0, %v1117
    %1119 = vdwg.mxu0
    %v1120 = vld [vmem:[%s15 + $0xf0] sm:$0xff]
    %v1121 = vld [vmem:[%s15 + $0xf8] sm:$0xff]
    %v1122 = vld [vmem:[%s15 + $0x100] sm:$0xff]
    %v1123 = vld [vmem:[%s15 + $0x108] sm:$0xff]
    %v1124 = vld [vmem:[%s15 + $0x110] sm:$0xff]
    %v1125 = vld [vmem:[%s15 + $0x118] sm:$0xff]
    %v1126 = vld [vmem:[%s15 + $0x120] sm:$0xff]
    %v1127 = vld [vmem:[%s15 + $0x128] sm:$0xff]
    %v1128 = vld [vmem:[%s15 + $0x130] sm:$0xff]
    %v1129 = vld [vmem:[%s15 + $0x138] sm:$0xff]
    %v1130 = vld [vmem:[%s15 + $0x140] sm:$0xff]
    %v1131 = vld [vmem:[%s15 + $0x148] sm:$0xff]
    %v1132 = vld [vmem:[%s15 + $0x150] sm:$0xff]
    %v1133 = vld [vmem:[%s15 + $0x158] sm:$0xff]
    %v1134 = vld [vmem:[%s15 + $0x160] sm:$0xff]
    %v1135 = vld [vmem:[%s15 + $0x168] sm:$0xff]
    %v1136 = vld [vmem:[%s15 + $0x170] sm:$0xff]
    %v1137 = vld [vmem:[%s15 + $0x178] sm:$0xff]
    %v1138 = vld [vmem:[%s15 + $0x180] sm:$0xff]
    %v1139 = vld [vmem:[%s15 + $0x188] sm:$0xff]
    %v1140 = vld [vmem:[%s15 + $0x190] sm:$0xff]
    %v1141 = vld [vmem:[%s15 + $0x198] sm:$0xff]
    %v1142 = vld [vmem:[%s15 + $0x1a0] sm:$0xff]
    %v1143 = vld [vmem:[%s15 + $0x1a8] sm:$0xff]
    %v1144 = vld [vmem:[%s15 + $0x1b0] sm:$0xff]
    %v1145 = vld [vmem:[%s15 + $0x1b8] sm:$0xff]
    %v1146 = vld [vmem:[%s15 + $0x1c0] sm:$0xff]
    %v1147 = vld [vmem:[%s15 + $0x1c8] sm:$0xff]
    %v1148 = vld [vmem:[%s15 + $0x1d0] sm:$0xff]
    %v1149 = vld [vmem:[%s15 + $0x1d8] sm:$0xff]
    %1150 = vmatpush.msra.mxu0 0.0
    %1151 = vmatpush.msra.mxu0 %v1148
    %1152 = vmatpush.msra.mxu0 %v1146
    %1153 = vmatpush.msra.mxu0 %v1144
    %1154 = vmatpush.msra.mxu0 %v1142
    %1155 = vmatpush.msra.mxu0 %v1140
    %1156 = vmatpush.msra.mxu0 %v1138
    %1157 = vmatpush.msra.mxu0 %v1136
    %1158 = vmatpush.msra.mxu0 %v1134
    %1159 = vmatpush.msra.mxu0 %v1132
    %1160 = vmatpush.msra.mxu0 %v1130
    %1161 = vmatpush.msra.mxu0 %v1128
    %1162 = vmatpush.msra.mxu0 %v1126
    %1163 = vmatpush.msra.mxu0 %v1124
    %1164 = vmatpush.msra.mxu0 %v1122
    %1165 = vmatpush.msra.mxu0 %v1120
    %1166 = vmatmul.f32.gmra.mxu0 %v1051
    %v1167 = vpop.f32.mrf.mxu0
    %v1168 = vadd.f32 0.0, %v1167
    %1169 = vmatmul.f32.gmra.mxu0 %v1054
    %v1170 = vpop.f32.mrf.mxu0
    %v1171 = vadd.f32 0.0, %v1170
    %1172 = vmatmul.f32.gmra.mxu0 %v1057
    %v1173 = vpop.f32.mrf.mxu0
    %v1174 = vadd.f32 0.0, %v1173
    %1175 = vmatmul.f32.gmra.mxu0 %v1060
    %v1176 = vpop.f32.mrf.mxu0
    %v1177 = vadd.f32 0.0, %v1176
    %1178 = vdwg.mxu0
    %1179 = vmatpush.msra.mxu0 0.0
    %1180 = vmatpush.msra.mxu0 %v1149
    %1181 = vmatpush.msra.mxu0 %v1147
    %1182 = vmatpush.msra.mxu0 %v1145
    %1183 = vmatpush.msra.mxu0 %v1143
    %1184 = vmatpush.msra.mxu0 %v1141
    %1185 = vmatpush.msra.mxu0 %v1139
    %1186 = vmatpush.msra.mxu0 %v1137
    %1187 = vmatpush.msra.mxu0 %v1135
    %1188 = vmatpush.msra.mxu0 %v1133
    %1189 = vmatpush.msra.mxu0 %v1131
    %1190 = vmatpush.msra.mxu0 %v1129
    %1191 = vmatpush.msra.mxu0 %v1127
    %1192 = vmatpush.msra.mxu0 %v1125
    %1193 = vmatpush.msra.mxu0 %v1123
    %1194 = vmatpush.msra.mxu0 %v1121
    %1195 = vmatmul.f32.gmra.mxu0 %v1051
    %v1196 = vpop.f32.mrf.mxu0
    %v1197 = vadd.f32 0.0, %v1196
    %1198 = vmatmul.f32.gmra.mxu0 %v1054
    %v1199 = vpop.f32.mrf.mxu0
    %v1200 = vadd.f32 0.0, %v1199
    %1201 = vmatmul.f32.gmra.mxu0 %v1057
    %v1202 = vpop.f32.mrf.mxu0
    %v1203 = vadd.f32 0.0, %v1202
    %1204 = vmatmul.f32.gmra.mxu0 %v1060
    %v1205 = vpop.f32.mrf.mxu0
    %v1206 = vadd.f32 0.0, %v1205
    %1207 = vdwg.mxu0
    %v1208 = vld [vmem:[%s15 + $0x1e0] sm:$0xff]
    %v1209 = vld [vmem:[%s15 + $0x1e8] sm:$0xff]
    %v1210 = vld [vmem:[%s15 + $0x1f0] sm:$0xff]
    %v1211 = vld [vmem:[%s15 + $0x1f8] sm:$0xff]
    %v1212 = vld [vmem:[%s15 + $0x200] sm:$0xff]
    %v1213 = vld [vmem:[%s15 + $0x208] sm:$0xff]
    %v1214 = vld [vmem:[%s15 + $0x210] sm:$0xff]
    %v1215 = vld [vmem:[%s15 + $0x218] sm:$0xff]
    %v1216 = vld [vmem:[%s15 + $0x220] sm:$0xff]
    %v1217 = vld [vmem:[%s15 + $0x228] sm:$0xff]
    %v1218 = vld [vmem:[%s15 + $0x230] sm:$0xff]
    %v1219 = vld [vmem:[%s15 + $0x238] sm:$0xff]
    %v1220 = vld [vmem:[%s15 + $0x240] sm:$0xff]
    %v1221 = vld [vmem:[%s15 + $0x248] sm:$0xff]
    %v1222 = vld [vmem:[%s15 + $0x250] sm:$0xff]
    %v1223 = vld [vmem:[%s15 + $0x258] sm:$0xff]
    %v1224 = vld [vmem:[%s15 + $0x260] sm:$0xff]
    %v1225 = vld [vmem:[%s15 + $0x268] sm:$0xff]
    %v1226 = vld [vmem:[%s15 + $0x270] sm:$0xff]
    %v1227 = vld [vmem:[%s15 + $0x278] sm:$0xff]
    %v1228 = vld [vmem:[%s15 + $0x280] sm:$0xff]
    %v1229 = vld [vmem:[%s15 + $0x288] sm:$0xff]
    %v1230 = vld [vmem:[%s15 + $0x290] sm:$0xff]
    %v1231 = vld [vmem:[%s15 + $0x298] sm:$0xff]
    %v1232 = vld [vmem:[%s15 + $0x2a0] sm:$0xff]
    %v1233 = vld [vmem:[%s15 + $0x2a8] sm:$0xff]
    %v1234 = vld [vmem:[%s15 + $0x2b0] sm:$0xff]
    %v1235 = vld [vmem:[%s15 + $0x2b8] sm:$0xff]
    %v1236 = vld [vmem:[%s15 + $0x2c0] sm:$0xff]
    %v1237 = vld [vmem:[%s15 + $0x2c8] sm:$0xff]
    %1238 = vmatpush.msra.mxu0 0.0
    %1239 = vmatpush.msra.mxu0 %v1236
    %1240 = vmatpush.msra.mxu0 %v1234
    %1241 = vmatpush.msra.mxu0 %v1232
    %1242 = vmatpush.msra.mxu0 %v1230
    %1243 = vmatpush.msra.mxu0 %v1228
    %1244 = vmatpush.msra.mxu0 %v1226
    %1245 = vmatpush.msra.mxu0 %v1224
    %1246 = vmatpush.msra.mxu0 %v1222
    %1247 = vmatpush.msra.mxu0 %v1220
    %1248 = vmatpush.msra.mxu0 %v1218
    %1249 = vmatpush.msra.mxu0 %v1216
    %1250 = vmatpush.msra.mxu0 %v1214
    %1251 = vmatpush.msra.mxu0 %v1212
    %1252 = vmatpush.msra.mxu0 %v1210
    %1253 = vmatpush.msra.mxu0 %v1208
    %1254 = vmatmul.f32.gmra.mxu0 %v1051
    %v1255 = vpop.f32.mrf.mxu0
    %v1256 = vadd.f32 0.0, %v1255
    %1257 = vmatmul.f32.gmra.mxu0 %v1054
    %v1258 = vpop.f32.mrf.mxu0
    %v1259 = vadd.f32 0.0, %v1258
    %1260 = vmatmul.f32.gmra.mxu0 %v1057
    %v1261 = vpop.f32.mrf.mxu0
    %v1262 = vadd.f32 0.0, %v1261
    %1263 = vmatmul.f32.gmra.mxu0 %v1060
    %v1264 = vpop.f32.mrf.mxu0
    %v1265 = vadd.f32 0.0, %v1264
    %1266 = vdwg.mxu0
    %1267 = vmatpush.msra.mxu0 0.0
    %1268 = vmatpush.msra.mxu0 %v1237
    %1269 = vmatpush.msra.mxu0 %v1235
    %1270 = vmatpush.msra.mxu0 %v1233
    %1271 = vmatpush.msra.mxu0 %v1231
    %1272 = vmatpush.msra.mxu0 %v1229
    %1273 = vmatpush.msra.mxu0 %v1227
    %1274 = vmatpush.msra.mxu0 %v1225
    %1275 = vmatpush.msra.mxu0 %v1223
    %1276 = vmatpush.msra.mxu0 %v1221
    %1277 = vmatpush.msra.mxu0 %v1219
    %1278 = vmatpush.msra.mxu0 %v1217
    %1279 = vmatpush.msra.mxu0 %v1215
    %1280 = vmatpush.msra.mxu0 %v1213
    %1281 = vmatpush.msra.mxu0 %v1211
    %1282 = vmatpush.msra.mxu0 %v1209
    %1283 = vmatmul.f32.gmra.mxu0 %v1051
    %v1284 = vpop.f32.mrf.mxu0
    %v1285 = vadd.f32 0.0, %v1284
    %1286 = vmatmul.f32.gmra.mxu0 %v1054
    %v1287 = vpop.f32.mrf.mxu0
    %v1288 = vadd.f32 0.0, %v1287
    %1289 = vmatmul.f32.gmra.mxu0 %v1057
    %v1290 = vpop.f32.mrf.mxu0
    %v1291 = vadd.f32 0.0, %v1290
    %1292 = vmatmul.f32.gmra.mxu0 %v1060
    %v1293 = vpop.f32.mrf.mxu0
    %v1294 = vadd.f32 0.0, %v1293
    %1295 = vdwg.mxu0
    %v1296 = vld [vmem:[%s15 + $0x2d0] sm:$0xff]
    %v1297 = vld [vmem:[%s15 + $0x2d8] sm:$0xff]
    %v1298 = vld [vmem:[%s15 + $0x2e0] sm:$0xff]
    %v1299 = vld [vmem:[%s15 + $0x2e8] sm:$0xff]
    %v1300 = vld [vmem:[%s15 + $0x2f0] sm:$0xff]
    %v1301 = vld [vmem:[%s15 + $0x2f8] sm:$0xff]
    %v1302 = vld [vmem:[%s15 + $0x300] sm:$0xff]
    %v1303 = vld [vmem:[%s15 + $0x308] sm:$0xff]
    %v1304 = vld [vmem:[%s15 + $0x310] sm:$0xff]
    %v1305 = vld [vmem:[%s15 + $0x318] sm:$0xff]
    %v1306 = vld [vmem:[%s15 + $0x320] sm:$0xff]
    %v1307 = vld [vmem:[%s15 + $0x328] sm:$0xff]
    %v1308 = vld [vmem:[%s15 + $0x330] sm:$0xff]
    %v1309 = vld [vmem:[%s15 + $0x338] sm:$0xff]
    %v1310 = vld [vmem:[%s15 + $0x340] sm:$0xff]
    %v1311 = vld [vmem:[%s15 + $0x348] sm:$0xff]
    %v1312 = vld [vmem:[%s15 + $0x350] sm:$0xff]
    %v1313 = vld [vmem:[%s15 + $0x358] sm:$0xff]
    %v1314 = vld [vmem:[%s15 + $0x360] sm:$0xff]
    %v1315 = vld [vmem:[%s15 + $0x368] sm:$0xff]
    %v1316 = vld [vmem:[%s15 + $0x370] sm:$0xff]
    %v1317 = vld [vmem:[%s15 + $0x378] sm:$0xff]
    %v1318 = vld [vmem:[%s15 + $0x380] sm:$0xff]
    %v1319 = vld [vmem:[%s15 + $0x388] sm:$0xff]
    %v1320 = vld [vmem:[%s15 + $0x390] sm:$0xff]
    %v1321 = vld [vmem:[%s15 + $0x398] sm:$0xff]
    %v1322 = vld [vmem:[%s15 + $0x3a0] sm:$0xff]
    %v1323 = vld [vmem:[%s15 + $0x3a8] sm:$0xff]
    %v1324 = vld [vmem:[%s15 + $0x3b0] sm:$0xff]
    %v1325 = vld [vmem:[%s15 + $0x3b8] sm:$0xff]
    %1326 = vmatpush.msra.mxu0 0.0
    %1327 = vmatpush.msra.mxu0 %v1324
    %1328 = vmatpush.msra.mxu0 %v1322
    %1329 = vmatpush.msra.mxu0 %v1320
    %1330 = vmatpush.msra.mxu0 %v1318
    %1331 = vmatpush.msra.mxu0 %v1316
    %1332 = vmatpush.msra.mxu0 %v1314
    %1333 = vmatpush.msra.mxu0 %v1312
    %1334 = vmatpush.msra.mxu0 %v1310
    %1335 = vmatpush.msra.mxu0 %v1308
    %1336 = vmatpush.msra.mxu0 %v1306
    %1337 = vmatpush.msra.mxu0 %v1304
    %1338 = vmatpush.msra.mxu0 %v1302
    %1339 = vmatpush.msra.mxu0 %v1300
    %1340 = vmatpush.msra.mxu0 %v1298
    %1341 = vmatpush.msra.mxu0 %v1296
    %1342 = vmatmul.f32.gmra.mxu0 %v1051
    %v1343 = vpop.f32.mrf.mxu0
    %v1344 = vadd.f32 0.0, %v1343
    %1345 = vmatmul.f32.gmra.mxu0 %v1054
    %v1346 = vpop.f32.mrf.mxu0
    %v1347 = vadd.f32 0.0, %v1346
    %1348 = vmatmul.f32.gmra.mxu0 %v1057
    %v1349 = vpop.f32.mrf.mxu0
    %v1350 = vadd.f32 0.0, %v1349
    %1351 = vmatmul.f32.gmra.mxu0 %v1060
    %v1352 = vpop.f32.mrf.mxu0
    %v1353 = vadd.f32 0.0, %v1352
    %1354 = vdwg.mxu0
    %1355 = vmatpush.msra.mxu0 0.0
    %1356 = vmatpush.msra.mxu0 %v1325
    %1357 = vmatpush.msra.mxu0 %v1323
    %1358 = vmatpush.msra.mxu0 %v1321
    %1359 = vmatpush.msra.mxu0 %v1319
    %1360 = vmatpush.msra.mxu0 %v1317
    %1361 = vmatpush.msra.mxu0 %v1315
    %1362 = vmatpush.msra.mxu0 %v1313
    %1363 = vmatpush.msra.mxu0 %v1311
    %1364 = vmatpush.msra.mxu0 %v1309
    %1365 = vmatpush.msra.mxu0 %v1307
    %1366 = vmatpush.msra.mxu0 %v1305
    %1367 = vmatpush.msra.mxu0 %v1303
    %1368 = vmatpush.msra.mxu0 %v1301
    %1369 = vmatpush.msra.mxu0 %v1299
    %1370 = vmatpush.msra.mxu0 %v1297
    %1371 = vmatmul.f32.gmra.mxu0 %v1051
    %v1372 = vpop.f32.mrf.mxu0
    %v1373 = vadd.f32 0.0, %v1372
    %1374 = vmatmul.f32.gmra.mxu0 %v1054
    %v1375 = vpop.f32.mrf.mxu0
    %v1376 = vadd.f32 0.0, %v1375
    %1377 = vmatmul.f32.gmra.mxu0 %v1057
    %v1378 = vpop.f32.mrf.mxu0
    %v1379 = vadd.f32 0.0, %v1378
    %1380 = vmatmul.f32.gmra.mxu0 %v1060
    %v1381 = vpop.f32.mrf.mxu0
    %v1382 = vadd.f32 0.0, %v1381
    %1383 = vdwg.mxu0
    %v1384 = vld [vmem:[%s17] sm:$0xff]
    %v1385 = vld [vmem:[%s17 + $0x8] sm:$0xff]
    %v1386 = vld [vmem:[%s17 + $0x10] sm:$0xff]
    %v1387 = vld [vmem:[%s17 + $0x18] sm:$0xff]
    %v1388 = vld [vmem:[%s16] sm:$0x3]
    %v1390 = vperm.slane %v1388, 0
    %v1391 = vperm.slane %v1388, 1
    %1394 = vmatpush.msra.mxu0 %v1353
    %1395 = vmatpush.msra.mxu0 %v1350
    %1396 = vmatpush.msra.mxu0 %v1347
    %1397 = vmatpush.msra.mxu0 %v1344
    %1398 = vmatpush.msra.mxu0 %v1265
    %1399 = vmatpush.msra.mxu0 %v1262
    %1400 = vmatpush.msra.mxu0 %v1259
    %1401 = vmatpush.msra.mxu0 %v1256
    %1402 = vmatpush.msra.mxu0 %v1177
    %1403 = vmatpush.msra.mxu0 %v1174
    %1404 = vmatpush.msra.mxu0 %v1171
    %1405 = vmatpush.msra.mxu0 %v1168
    %1406 = vmatpush.msra.mxu0 %v1089
    %1407 = vmatpush.msra.mxu0 %v1086
    %1408 = vmatpush.msra.mxu0 %v1083
    %1409 = vmatpush.msra.mxu0 %v1080
    %1410 = vmatmul.f32.gmra.mxu0 %v1384
    %v1411 = vpop.f32.mrf.mxu0
    %v1412 = vadd.f32 %v1390, %v1411
    %1413 = vmatmul.f32.gmra.mxu0 %v1385
    %v1414 = vpop.f32.mrf.mxu0
    %v1415 = vadd.f32 %v1390, %v1414
    %1416 = vmatmul.f32.gmra.mxu0 %v1386
    %v1417 = vpop.f32.mrf.mxu0
    %v1418 = vadd.f32 %v1390, %v1417
    %1419 = vmatmul.f32.gmra.mxu0 %v1387
    %v1420 = vpop.f32.mrf.mxu0
    %v1421 = vadd.f32 %v1390, %v1420
    %1422 = vdwg.mxu0
    %1423 = vmatpush.msra.mxu0 %v1382
    %1424 = vmatpush.msra.mxu0 %v1379
    %1425 = vmatpush.msra.mxu0 %v1376
    %1426 = vmatpush.msra.mxu0 %v1373
    %1427 = vmatpush.msra.mxu0 %v1294
    %1428 = vmatpush.msra.mxu0 %v1291
    %1429 = vmatpush.msra.mxu0 %v1288
    %1430 = vmatpush.msra.mxu0 %v1285
    %1431 = vmatpush.msra.mxu0 %v1206
    %1432 = vmatpush.msra.mxu0 %v1203
    %1433 = vmatpush.msra.mxu0 %v1200
    %1434 = vmatpush.msra.mxu0 %v1197
    %1435 = vmatpush.msra.mxu0 %v1118
    %1436 = vmatpush.msra.mxu0 %v1115
    %1437 = vmatpush.msra.mxu0 %v1112
    %1438 = vmatpush.msra.mxu0 %v1109
    %1439 = vmatmul.f32.gmra.mxu0 %v1384
    %v1440 = vpop.f32.mrf.mxu0
    %v1441 = vadd.f32 %v1391, %v1440
    %1442 = vmatmul.f32.gmra.mxu0 %v1385
    %v1443 = vpop.f32.mrf.mxu0
    %v1444 = vadd.f32 %v1391, %v1443
    %1445 = vmatmul.f32.gmra.mxu0 %v1386
    %v1446 = vpop.f32.mrf.mxu0
    %v1447 = vadd.f32 %v1391, %v1446
    %1448 = vmatmul.f32.gmra.mxu0 %v1387
    %v1449 = vpop.f32.mrf.mxu0
    %v1450 = vadd.f32 %v1391, %v1449
    %1451 = vdwg.mxu0
    %1452 = vst [vmem:[%s19] sm:$0xff] %v1412
    %vm1453 = vcmask 523264
    %1454 = vst.msk [vmem:[%s19 + $0x8] sm:$0xff] %vm1453, %v1441
    %1455 = vst [vmem:[%s19 + $0x10] sm:$0xff] %v1415
    %1456 = vst.msk [vmem:[%s19 + $0x18] sm:$0xff] %vm1453, %v1444
    %1457 = vst [vmem:[%s19 + $0x20] sm:$0xff] %v1418
    %1458 = vst.msk [vmem:[%s19 + $0x28] sm:$0xff] %vm1453, %v1447
    %1459 = vst [vmem:[%s19 + $0x30] sm:$0xff] %v1421
    %1460 = vst.msk [vmem:[%s19 + $0x38] sm:$0xff] %vm1453, %v1450
    // Predicated region
    $region74: #{forward.1} parent=1 // pred_check
      _
    $region75: #{forward.1} parent=1 // pred_check_branch
      %1462 = sbr.rel (0) target = $region77
    $region76: #{forward.1} parent=1 // pred_region
      %1464 = vsyncadd [#allocation3], 0
      %s1466 = sshll.u32 [#allocation2], 4
      %s1467 = int_to_ptr.vmem [resolvable:$true] %s1466
      %s1468 = sshll.u32 %s18, 4
      %s1469 = int_to_ptr.hbm [resolvable:$true] %s1468
      %1471 = dma.vmem_to_hbm [thread:$0]  %s1467, 32, %s1469, [#allocation3]
    $region77: #{forward.1} parent=1 // pred_fallthru
      _
    // Predicated region
    $region78: #{forward.1} parent=1 // pred_check
      _
    $region79: #{forward.1} parent=1 // pred_check_branch
      %1473 = sbr.rel (0) target = $region81
    $region80: #{forward.1} parent=1 // pred_region
      _
    $region81: #{forward.1} parent=1 // pred_fallthru
      _
    // Predicated region
    $region82: #{forward.1} parent=1 // pred_check
      _
    $region83: #{forward.1} parent=1 // pred_check_branch
      %1475 = sbr.rel (0) target = $region85
    $region84: #{forward.1} parent=1 // pred_region
      %1477 = dma.done [#allocation3], 32
    $region85: #{forward.1} parent=1 // pred_fallthru
      _
    // Predicated region
    $region86: #{forward.1} parent=1 // pred_check
      _
    $region87: #{forward.1} parent=1 // pred_check_branch
      %1479 = sbr.rel (0) target = $region89
    $region88: #{forward.1} parent=1 // pred_region
      _
    $region89: #{forward.1} parent=1 // pred_fallthru
      _
    %1480 = vsyncpa [#allocation3], 1

</llo_original>
